<compile_context>
chip_gen: v7x
topology: tpu7x:2x2x1
jax: 0.10.0
libtpu: 0.0.40
codegen_flags: <defaults>
</compile_context>

<pallas_src>
import functools

import jax
import jax.numpy as jnp
from jax import lax
from jax.experimental import pallas as pl
from jax.experimental.pallas import tpu as pltpu


# ---------------------------------------------------------------------------
# Generation-aware VMEM budgeting
# ---------------------------------------------------------------------------
def _vmem_capacity_bytes():
    try:
        return int(pltpu.get_tpu_info().vmem_capacity_bytes)
    except Exception:
        return 64 * 1024 * 1024        # conservative (v7x-sized) fallback


# ---------------------------------------------------------------------------
# Tiled linear: y = x @ W_t + b, W_t already in (K, N) layout.
# ---------------------------------------------------------------------------
def _linear_kernel(x_ref, w_ref, b_ref, o_ref, acc_ref):
    k = pl.program_id(2)

    @pl.when(k == 0)
    def _():
        acc_ref[...] = jnp.zeros_like(acc_ref)

    acc_ref[...] += jnp.dot(x_ref[...], w_ref[...],
                            preferred_element_type=jnp.float32)

    @pl.when(k == pl.num_programs(2) - 1)
    def _():
        o_ref[...] = (acc_ref[...] +
                      b_ref[...].astype(jnp.float32)).astype(o_ref.dtype)


def _divisor_tiles(dim, candidates):
    out = [c for c in candidates if dim % c == 0]
    # TODO(synk): for huge non-divisible dims, use pl.cdiv grids with partial
    # blocks instead of falling back to the full dimension.
    return out if out else [dim]


def _select_tiles(M, K, N, itemsize, budget_bytes):
    # tm multiples of 16 for sub-32-bit dtypes (bf16 packs 16 rows/sublane tile).
    tm_c = (512, 256, 128, 64, 32, 16) + ((8,) if itemsize >= 4 else ())
    tkn_c = (1024, 512, 256, 128)
    best = None
    for tm in _divisor_tiles(M, tm_c):
        for tk in _divisor_tiles(K, tkn_c):
            for tn in _divisor_tiles(N, tkn_c):
                vmem = (2 * (tm * tk + tk * tn + tn) * itemsize   # dbl-buffered inputs
                        + 2 * tm * tn * itemsize                  # dbl-buffered output
                        + tm * tn * 4)                            # f32 accumulator
                if vmem <= budget_bytes:
                    key = (tm * tk * tn, tn, tm)                  # most work per step
                    if best is None or key > best[0]:
                        best = (key, (tm, tk, tn))
    if best is None:       # even the smallest legal tiles exceed the budget
        best = (None, (_divisor_tiles(M, tm_c)[-1],
                       _divisor_tiles(K, tkn_c)[-1],
                       _divisor_tiles(N, tkn_c)[-1]))
    return best[1]


def linear_pallas(x2d, w_t, b):
    """x2d: (M, K), w_t: (K, N) (pre-transposed), b: (N,) -> (M, N)."""
    M, K = x2d.shape
    N = w_t.shape[1]
    cap = _vmem_capacity_bytes()
    tm, tk, tn = _select_tiles(M, K, N, x2d.dtype.itemsize, cap // 2)
    grid = (M // tm, N // tn, K // tk)
    return pl.pallas_call(
        _linear_kernel,
        out_shape=jax.ShapeDtypeStruct((M, N), x2d.dtype),
        grid=grid,
        in_specs=[
            pl.BlockSpec((tm, tk), lambda i, j, k: (i, k)),
            pl.BlockSpec((tk, tn), lambda i, j, k: (k, j)),
            pl.BlockSpec((1, tn), lambda i, j, k: (0, j)),
        ],
        out_specs=pl.BlockSpec((tm, tn), lambda i, j, k: (i, j)),
        scratch_shapes=[pltpu.VMEM((tm, tn), jnp.float32)],
        compiler_params=pltpu.CompilerParams(
            dimension_semantics=("parallel", "parallel", "arbitrary"),
            vmem_limit_bytes=int(cap * 3 // 4)),
    )(x2d, w_t, b.reshape(1, N))


# ---------------------------------------------------------------------------
# Cross-modal attention + fused out-projection.
# One grid point = one (stream, batch); queries come from stream s, keys and
# values from stream 1-s (the cross-modal swap is done by the kv index_map).
# ---------------------------------------------------------------------------
def _attn_kernel(q_ref, kv_ref, wout_ref, bout_ref, o_ref, acc_ref, *, num_heads):
    # q_ref : (L, C)   queries of this stream; 1/sqrt(Dh) already folded into W_q.
    # kv_ref: (L, 2C)  [k | v] slabs of the OTHER stream.
    # wout_ref: (C, C) out_proj weight, (in, out) layout.  bout_ref: (1, C).
    # o_ref : (L, C)   projected output.  acc_ref: f32 VMEM (L, C) scratch.
    L, C = q_ref.shape
    dh = C // num_heads
    # Static unroll over heads (small H here).
    # TODO(synk): switch to lax.fori_loop / a head grid axis and flash-style
    # KV tiling of the (L, L) scores once H or L grows (mandatory for v7x's
    # 64 MiB VMEM at real sequence lengths).
    for h in range(num_heads):
        lo, hi = h * dh, (h + 1) * dh
        q = q_ref[:, lo:hi]
        k = kv_ref[:, lo:hi]
        v = kv_ref[:, C + lo:C + hi]
        # q @ k^T without materializing k.T: contract the Dh axes directly.
        s = lax.dot_general(q, k, (((1,), (1,)), ((), ())),
                            preferred_element_type=jnp.float32)
        m = jnp.max(s, axis=-1, keepdims=True)
        p = jnp.exp(s - m)
        denom = jnp.sum(p, axis=-1, keepdims=True)
        o = jnp.dot(p.astype(v.dtype), v, preferred_element_type=jnp.float32)
        # Defer softmax normalization to the (L, Dh) result; EUP reciprocal.
        acc_ref[:, lo:hi] = o * pl.reciprocal(denom, approx=True)
    # Fused out-projection epilogue: one lane-dense (L, C) store to HBM.
    proj = jnp.dot(acc_ref[...].astype(wout_ref.dtype), wout_ref[...],
                   preferred_element_type=jnp.float32)
    o_ref[...] = (proj + bout_ref[...].astype(jnp.float32)).astype(o_ref.dtype)


def attention_out_pallas(q, kv, w_out_t, b_out2d, num_heads):
    """q: (2,B,L,C), kv: (2,B,L,2C) -> projected output (2,B,L,C)."""
    S, B, L, C = q.shape
    kern = functools.partial(_attn_kernel, num_heads=num_heads)
    return pl.pallas_call(
        kern,
        out_shape=jax.ShapeDtypeStruct((S, B, L, C), q.dtype),
        grid=(S, B),
        in_specs=[
            pl.BlockSpec((None, None, L, C), lambda s, b: (s, b, 0, 0)),
            pl.BlockSpec((None, None, L, 2 * C), lambda s, b: (1 - s, b, 0, 0)),
            pl.BlockSpec((C, C), lambda s, b: (0, 0)),
            pl.BlockSpec((1, C), lambda s, b: (0, 0)),
        ],
        out_specs=pl.BlockSpec((None, None, L, C), lambda s, b: (s, b, 0, 0)),
        scratch_shapes=[pltpu.VMEM((L, C), jnp.float32)],
        compiler_params=pltpu.CompilerParams(
            dimension_semantics=("parallel", "parallel")),
    )(q, kv, w_out_t, b_out2d)


# ---------------------------------------------------------------------------
# One-time weight preparation (outside jit / outside the hot path).
# ---------------------------------------------------------------------------
def prepare_params(w_qkv, b_qkv, w_out, b_out, num_heads):
    """Repack PyTorch weights:
      * qkv output lanes: interleaved (H, 3, Dh) -> contiguous [q | k | v],
      * fold 1/sqrt(Dh) into the q slab of W and b,
      * split into q projection (C out) and kv projection (2C out),
      * pre-transpose everything to the (K, N) layout the kernels consume.
    """
    three_c, c = w_qkv.shape
    dh = c // num_heads
    scale = 1.0 / (dh ** 0.5)
    w = w_qkv.reshape(num_heads, 3, dh, c).transpose(1, 0, 2, 3).reshape(3 * c, c)
    b = b_qkv.reshape(num_heads, 3, dh).transpose(1, 0, 2).reshape(3 * c)
    w = w.at[:c].multiply(scale)
    b = b.at[:c].multiply(scale)
    return dict(
        w_q_t=jnp.transpose(w[:c]),        # (C, C)
        b_q=b[:c],                         # (C,)
        w_kv_t=jnp.transpose(w[c:]),       # (C, 2C)
        b_kv=b[c:],                        # (2C,)
        w_out_t=jnp.transpose(w_out),      # (C, C)
        b_out=b_out.reshape(1, c),         # (1, C)
    )


# ---------------------------------------------------------------------------
# Full forward, matching Cross_Modal_Attention.forward
# ---------------------------------------------------------------------------
@functools.partial(jax.jit, static_argnames=("num_heads",))
def cross_modal_attention_fwd(x1, x2, params, *, num_heads):
    B, L, C = x1.shape
    xs = jnp.stack([x1, x2], axis=0).reshape(2 * B * L, C)          # (2BL, C)
    q = linear_pallas(xs, params["w_q_t"], params["b_q"])           # (2BL, C)
    kv = linear_pallas(xs, params["w_kv_t"], params["b_kv"])        # (2BL, 2C)
    q = q.reshape(2, B, L, C)
    kv = kv.reshape(2, B, L, 2 * C)
    out = attention_out_pallas(q, kv, params["w_out_t"], params["b_out"],
                               num_heads)                           # (2, B, L, C)
    return out[0], out[1]


def cross_modal_attention(x1, x2, w_qkv, b_qkv, w_out, b_out, num_heads):
    """Convenience wrapper taking PyTorch-convention weights.
    Call prepare_params once and reuse it when invoking repeatedly."""
    params = prepare_params(w_qkv, b_qkv, w_out, b_out, num_heads)
    return cross_modal_attention_fwd(x1, x2, params, num_heads=num_heads)


# ---------------------------------------------------------------------------
# Pure-JAX reference (mirror of the PyTorch forward) for a correctness check.
# ---------------------------------------------------------------------------
def ref_forward(x1, x2, w_qkv, b_qkv, w_out, b_out, H):
    B, L, C = x1.shape
    Dh = C // H

    def split(x):
        y = x @ w_qkv.T + b_qkv
        y = jnp.transpose(y.reshape(B, L, H, 3, Dh), (3, 0, 2, 1, 4))
        return y[0], y[1], y[2]

    q1, k1_, v1 = split(x1)
    q2, k2_, v2 = split(x2)
    scale = 1.0 / Dh ** 0.5
    a1 = jax.nn.softmax(q1 @ jnp.swapaxes(k2_, -2, -1) * scale, axis=-1)
    a2 = jax.nn.softmax(q2 @ jnp.swapaxes(k1_, -2, -1) * scale, axis=-1)
    o1 = jnp.swapaxes(a1 @ v2, 1, 2).reshape(B, L, C)
    o2 = jnp.swapaxes(a2 @ v1, 1, 2).reshape(B, L, C)
    return o1 @ w_out.T + b_out, o2 @ w_out.T + b_out


if __name__ == "__main__":
    B, L, C, H = 2, 8, 32, 4   # batch, seq length, embed_dim, num_heads (Dh = 8)

    key = jax.random.PRNGKey(0)
    kx1, kx2, kw1, kb1, kw2, kb2 = jax.random.split(key, 6)
    x1 = jax.random.normal(kx1, (B, L, C), jnp.float32)
    x2 = jax.random.normal(kx2, (B, L, C), jnp.float32)

    # PyTorch nn.Linear parameter shapes: (out_features, in_features), (out,).
    w_qkv = jax.random.normal(kw1, (3 * C, C), jnp.float32) * 0.1
    b_qkv = jax.random.normal(kb1, (3 * C,), jnp.float32) * 0.1
    w_out = jax.random.normal(kw2, (C, C), jnp.float32) * 0.1
    b_out = jax.random.normal(kb2, (C,), jnp.float32) * 0.1

    params = prepare_params(w_qkv, b_qkv, w_out, b_out, H)   # once, outside jit
    out1, out2 = cross_modal_attention_fwd(x1, x2, params, num_heads=H)
    jax.block_until_ready((out1, out2))

    r1, r2 = ref_forward(x1, x2, w_qkv, b_qkv, w_out, b_out, H)
    assert out1.shape == (B, L, C) and out2.shape == (B, L, C)
    # Tolerance accommodates the EUP approximate reciprocal used for the
    # softmax normalization (pl.reciprocal(approx=True)); use approx=False for
    # bitwise-tight comparisons / training.
    assert jnp.allclose(out1, r1, atol=1e-2, rtol=1e-2), float(jnp.abs(out1 - r1).max())
    assert jnp.allclose(out2, r2, atol=1e-2, rtol=1e-2), float(jnp.abs(out2 - r2).max())

    print("KERNEL_OK")
</pallas_src>

<mosaic_0001>
module attributes {stable_mosaic.version = 11 : i64} {
  func.func @_linear_kernel(%arg0: i32, %arg1: i32, %arg2: i32, %arg3: memref<32x32xf32, #tpu.memory_space<vmem>>, %arg4: memref<32x64xf32, #tpu.memory_space<vmem>>, %arg5: memref<1x64xf32, #tpu.memory_space<vmem>>, %arg6: memref<32x64xf32, #tpu.memory_space<vmem>>, %arg7: memref<32x64xf32, #tpu.memory_space<vmem>>) attributes {dimension_semantics = [#tpu.dimension_semantics<parallel>, #tpu.dimension_semantics<parallel>, #tpu.dimension_semantics<arbitrary>], iteration_bounds = array<i64: 1, 1, 1>, scalar_prefetch = 0 : i64, scratch_operands = 1 : i64, tpu.core_type = #tpu.core_type<tc>, window_params = [{transform_indices = @transform_0, window_bounds = array<i64: 32, 32>}, {transform_indices = @transform_1, window_bounds = array<i64: 32, 64>}, {transform_indices = @transform_2, window_bounds = array<i64: 1, 64>}, {transform_indices = @transform_3, window_bounds = array<i64: 32, 64>}]} {
    %c0_i32 = arith.constant 0 : i32
    %0 = arith.cmpi eq, %arg2, %c0_i32 : i32
    %1 = arith.extui %0 : i1 to i32
    %c0_i32_0 = arith.constant 0 : i32
    %2 = arith.cmpi ne, %1, %c0_i32_0 : i32
    scf.if %2 {
      %cst_10 = arith.constant 0.000000e+00 : f32
      %12 = vector.broadcast %cst_10 : f32 to vector<32x64xf32>
      %c0_11 = arith.constant 0 : index
      %c0_12 = arith.constant 0 : index
      %13 = vector.load %arg7[%c0_11, %c0_12] : memref<32x64xf32, #tpu.memory_space<vmem>>, vector<32x64xf32>
      tpu.vector_store %arg7[%c0_11, %c0_12], %12 {strides = array<i32>} : memref<32x64xf32, #tpu.memory_space<vmem>>, vector<32x64xf32>,
    } else {
    }
    %c0 = arith.constant 0 : index
    %c0_1 = arith.constant 0 : index
    %3 = vector.load %arg7[%c0, %c0_1] : memref<32x64xf32, #tpu.memory_space<vmem>>, vector<32x64xf32>
    %c0_2 = arith.constant 0 : index
    %c0_3 = arith.constant 0 : index
    %4 = vector.load %arg3[%c0_2, %c0_3] : memref<32x32xf32, #tpu.memory_space<vmem>>, vector<32x32xf32>
    %c0_4 = arith.constant 0 : index
    %c0_5 = arith.constant 0 : index
    %5 = vector.load %arg4[%c0_4, %c0_5] : memref<32x64xf32, #tpu.memory_space<vmem>>, vector<32x64xf32>
    %cst = arith.constant dense<0.000000e+00> : vector<32x64xf32>
    %6 = tpu.matmul %4, %5, %cst {dimension_numbers = #tpu.dot_dimension_numbers<[1], [0], [0], [1], [0, 0, 1, 1], [], []>} : vector<32x32xf32>, vector<32x64xf32>, vector<32x64xf32> -> vector<32x64xf32>
    %7 = arith.addf %3, %6 : vector<32x64xf32>
    %c0_6 = arith.constant 0 : index
    %c0_7 = arith.constant 0 : index
    %8 = vector.load %arg7[%c0_6, %c0_7] : memref<32x64xf32, #tpu.memory_space<vmem>>, vector<32x64xf32>
    tpu.vector_store %arg7[%c0_6, %c0_7], %7 {strides = array<i32>} : memref<32x64xf32, #tpu.memory_space<vmem>>, vector<32x64xf32>,
    %c0_i32_8 = arith.constant 0 : i32
    %9 = arith.cmpi eq, %arg2, %c0_i32_8 : i32
    %10 = arith.extui %9 : i1 to i32
    %c0_i32_9 = arith.constant 0 : i32
    %11 = arith.cmpi ne, %10, %c0_i32_9 : i32
    scf.if %11 {
      %c0_10 = arith.constant 0 : index
      %c0_11 = arith.constant 0 : index
      %12 = vector.load %arg7[%c0_10, %c0_11] : memref<32x64xf32, #tpu.memory_space<vmem>>, vector<32x64xf32>
      %c0_12 = arith.constant 0 : index
      %c0_13 = arith.constant 0 : index
      %13 = vector.load %arg5[%c0_12, %c0_13] : memref<1x64xf32, #tpu.memory_space<vmem>>, vector<1x64xf32>
      %14 = vector.broadcast %13 : vector<1x64xf32> to vector<32x64xf32>
      %15 = arith.addf %12, %14 : vector<32x64xf32>
      %c0_14 = arith.constant 0 : index
      %c0_15 = arith.constant 0 : index
      %16 = vector.load %arg6[%c0_14, %c0_15] : memref<32x64xf32, #tpu.memory_space<vmem>>, vector<32x64xf32>
      tpu.vector_store %arg6[%c0_14, %c0_15], %15 {strides = array<i32>} : memref<32x64xf32, #tpu.memory_space<vmem>>, vector<32x64xf32>,
    } else {
    }
    return
  }
  func.func @transform_0(%arg0: i32, %arg1: i32, %arg2: i32) -> (i32, i32) {
    %c0_i32 = arith.constant 0 : i32
    return %arg0, %arg2 : i32, i32
  }
  func.func @transform_1(%arg0: i32, %arg1: i32, %arg2: i32) -> (i32, i32) {
    %c0_i32 = arith.constant 0 : i32
    return %arg2, %arg1 : i32, i32
  }
  func.func @transform_2(%arg0: i32, %arg1: i32, %arg2: i32) -> (i32, i32) {
    %c0_i32 = arith.constant 0 : i32
    %c0_i32_0 = arith.constant 0 : i32
    return %c0_i32, %arg1 : i32, i32
  }
  func.func @transform_3(%arg0: i32, %arg1: i32, %arg2: i32) -> (i32, i32) {
    %c0_i32 = arith.constant 0 : i32
    return %arg0, %arg1 : i32, i32
  }
}

module attributes {stable_mosaic.version = 11 : i64} {
  func.func @_linear_kernel(%arg0: i32, %arg1: i32, %arg2: i32, %arg3: memref<32x32xf32, #tpu.memory_space<vmem>>, %arg4: memref<32x32xf32, #tpu.memory_space<vmem>>, %arg5: memref<1x32xf32, #tpu.memory_space<vmem>>, %arg6: memref<32x32xf32, #tpu.memory_space<vmem>>, %arg7: memref<32x32xf32, #tpu.memory_space<vmem>>) attributes {dimension_semantics = [#tpu.dimension_semantics<parallel>, #tpu.dimension_semantics<parallel>, #tpu.dimension_semantics<arbitrary>], iteration_bounds = array<i64: 1, 1, 1>, scalar_prefetch = 0 : i64, scratch_operands = 1 : i64, tpu.core_type = #tpu.core_type<tc>, window_params = [{transform_indices = @transform_0, window_bounds = array<i64: 32, 32>}, {transform_indices = @transform_1, window_bounds = array<i64: 32, 32>}, {transform_indices = @transform_2, window_bounds = array<i64: 1, 32>}, {transform_indices = @transform_3, window_bounds = array<i64: 32, 32>}]} {
    %c0_i32 = arith.constant 0 : i32
    %0 = arith.cmpi eq, %arg2, %c0_i32 : i32
    %1 = arith.extui %0 : i1 to i32
    %c0_i32_0 = arith.constant 0 : i32
    %2 = arith.cmpi ne, %1, %c0_i32_0 : i32
    scf.if %2 {
      %cst_10 = arith.constant 0.000000e+00 : f32
      %12 = vector.broadcast %cst_10 : f32 to vector<32x32xf32>
      %c0_11 = arith.constant 0 : index
      %c0_12 = arith.constant 0 : index
      %13 = vector.load %arg7[%c0_11, %c0_12] : memref<32x32xf32, #tpu.memory_space<vmem>>, vector<32x32xf32>
      tpu.vector_store %arg7[%c0_11, %c0_12], %12 {strides = array<i32>} : memref<32x32xf32, #tpu.memory_space<vmem>>, vector<32x32xf32>,
    } else {
    }
    %c0 = arith.constant 0 : index
    %c0_1 = arith.constant 0 : index
    %3 = vector.load %arg7[%c0, %c0_1] : memref<32x32xf32, #tpu.memory_space<vmem>>, vector<32x32xf32>
    %c0_2 = arith.constant 0 : index
    %c0_3 = arith.constant 0 : index
    %4 = vector.load %arg3[%c0_2, %c0_3] : memref<32x32xf32, #tpu.memory_space<vmem>>, vector<32x32xf32>
    %c0_4 = arith.constant 0 : index
    %c0_5 = arith.constant 0 : index
    %5 = vector.load %arg4[%c0_4, %c0_5] : memref<32x32xf32, #tpu.memory_space<vmem>>, vector<32x32xf32>
    %cst = arith.constant dense<0.000000e+00> : vector<32x32xf32>
    %6 = tpu.matmul %4, %5, %cst {dimension_numbers = #tpu.dot_dimension_numbers<[1], [0], [0], [1], [0, 0, 1, 1], [], []>} : vector<32x32xf32>, vector<32x32xf32>, vector<32x32xf32> -> vector<32x32xf32>
    %7 = arith.addf %3, %6 : vector<32x32xf32>
    %c0_6 = arith.constant 0 : index
    %c0_7 = arith.constant 0 : index
    %8 = vector.load %arg7[%c0_6, %c0_7] : memref<32x32xf32, #tpu.memory_space<vmem>>, vector<32x32xf32>
    tpu.vector_store %arg7[%c0_6, %c0_7], %7 {strides = array<i32>} : memref<32x32xf32, #tpu.memory_space<vmem>>, vector<32x32xf32>,
    %c0_i32_8 = arith.constant 0 : i32
    %9 = arith.cmpi eq, %arg2, %c0_i32_8 : i32
    %10 = arith.extui %9 : i1 to i32
    %c0_i32_9 = arith.constant 0 : i32
    %11 = arith.cmpi ne, %10, %c0_i32_9 : i32
    scf.if %11 {
      %c0_10 = arith.constant 0 : index
      %c0_11 = arith.constant 0 : index
      %12 = vector.load %arg7[%c0_10, %c0_11] : memref<32x32xf32, #tpu.memory_space<vmem>>, vector<32x32xf32>
      %c0_12 = arith.constant 0 : index
      %c0_13 = arith.constant 0 : index
      %13 = vector.load %arg5[%c0_12, %c0_13] : memref<1x32xf32, #tpu.memory_space<vmem>>, vector<1x32xf32>
      %14 = vector.broadcast %13 : vector<1x32xf32> to vector<32x32xf32>
      %15 = arith.addf %12, %14 : vector<32x32xf32>
      %c0_14 = arith.constant 0 : index
      %c0_15 = arith.constant 0 : index
      %16 = vector.load %arg6[%c0_14, %c0_15] : memref<32x32xf32, #tpu.memory_space<vmem>>, vector<32x32xf32>
      tpu.vector_store %arg6[%c0_14, %c0_15], %15 {strides = array<i32>} : memref<32x32xf32, #tpu.memory_space<vmem>>, vector<32x32xf32>,
    } else {
    }
    return
  }
  func.func @transform_0(%arg0: i32, %arg1: i32, %arg2: i32) -> (i32, i32) {
    %c0_i32 = arith.constant 0 : i32
    return %arg0, %arg2 : i32, i32
  }
  func.func @transform_1(%arg0: i32, %arg1: i32, %arg2: i32) -> (i32, i32) {
    %c0_i32 = arith.constant 0 : i32
    return %arg2, %arg1 : i32, i32
  }
  func.func @transform_2(%arg0: i32, %arg1: i32, %arg2: i32) -> (i32, i32) {
    %c0_i32 = arith.constant 0 : i32
    %c0_i32_0 = arith.constant 0 : i32
    return %c0_i32, %arg1 : i32, i32
  }
  func.func @transform_3(%arg0: i32, %arg1: i32, %arg2: i32) -> (i32, i32) {
    %c0_i32 = arith.constant 0 : i32
    return %arg0, %arg1 : i32, i32
  }
}

module attributes {stable_mosaic.version = 11 : i64} {
  func.func @_attn_kernel(%arg0: i32, %arg1: i32, %arg2: memref<1x1x8x32xf32, #tpu.memory_space<vmem>>, %arg3: memref<1x1x8x64xf32, #tpu.memory_space<vmem>>, %arg4: memref<32x32xf32, #tpu.memory_space<vmem>>, %arg5: memref<1x32xf32, #tpu.memory_space<vmem>>, %arg6: memref<1x1x8x32xf32, #tpu.memory_space<vmem>>, %arg7: memref<8x32xf32, #tpu.memory_space<vmem>>) attributes {dimension_semantics = [#tpu.dimension_semantics<parallel>, #tpu.dimension_semantics<parallel>], iteration_bounds = array<i64: 2, 2>, scalar_prefetch = 0 : i64, scratch_operands = 1 : i64, tpu.core_type = #tpu.core_type<tc>, window_params = [{transform_indices = @transform_0, window_bounds = array<i64: 1, 1, 8, 32>}, {transform_indices = @transform_1, window_bounds = array<i64: 1, 1, 8, 64>}, {pipeline_mode = #tpu.pipeline_mode<synchronous>, transform_indices = @transform_2, window_bounds = array<i64: 32, 32>}, {pipeline_mode = #tpu.pipeline_mode<synchronous>, transform_indices = @transform_3, window_bounds = array<i64: 1, 32>}, {transform_indices = @transform_4, window_bounds = array<i64: 1, 1, 8, 32>}]} {
    %c0 = arith.constant 0 : index
    %c0_0 = arith.constant 0 : index
    %c0_1 = arith.constant 0 : index
    %c0_2 = arith.constant 0 : index
    %0 = vector.load %arg2[%c0, %c0_0, %c0_1, %c0_2] : memref<1x1x8x32xf32, #tpu.memory_space<vmem>>, vector<1x1x8x8xf32>
    %1 = vector.shape_cast %0 : vector<1x1x8x8xf32> to vector<8x8xf32>
    %c0_3 = arith.constant 0 : index
    %c0_4 = arith.constant 0 : index
    %c0_5 = arith.constant 0 : index
    %c0_6 = arith.constant 0 : index
    %2 = vector.load %arg3[%c0_3, %c0_4, %c0_5, %c0_6] : memref<1x1x8x64xf32, #tpu.memory_space<vmem>>, vector<1x1x8x8xf32>
    %3 = vector.shape_cast %2 : vector<1x1x8x8xf32> to vector<8x8xf32>
    %c0_7 = arith.constant 0 : index
    %c0_8 = arith.constant 0 : index
    %c0_9 = arith.constant 0 : index
    %c32 = arith.constant 32 : index
    %4 = vector.load %arg3[%c0_7, %c0_8, %c0_9, %c32] : memref<1x1x8x64xf32, #tpu.memory_space<vmem>>, vector<1x1x8x8xf32>
    %5 = vector.shape_cast %4 : vector<1x1x8x8xf32> to vector<8x8xf32>
    %cst = arith.constant dense<0.000000e+00> : vector<8x8xf32>
    %6 = tpu.matmul %1, %3, %cst {dimension_numbers = #tpu.dot_dimension_numbers<[1], [1], [0], [0], [0, 0, 1, 0], [], []>} : vector<8x8xf32>, vector<8x8xf32>, vector<8x8xf32> -> vector<8x8xf32>
    %cst_10 = arith.constant dense<0xFF800000> : vector<8xf32>
    %7 = vector.multi_reduction <maximumf>, %6, %cst_10 [1] : vector<8x8xf32> to vector<8xf32>
    %8 = vector.shape_cast %7 : vector<8xf32> to vector<8x1xf32>
    %9 = vector.broadcast %8 : vector<8x1xf32> to vector<8x8xf32>
    %10 = arith.subf %6, %9 : vector<8x8xf32>
    %11 = math.exp %10 : vector<8x8xf32>
    %cst_11 = arith.constant dense<0.000000e+00> : vector<8xf32>
    %12 = vector.multi_reduction <add>, %11, %cst_11 [1] : vector<8x8xf32> to vector<8xf32>
    %13 = vector.shape_cast %12 : vector<8xf32> to vector<8x1xf32>
    %cst_12 = arith.constant dense<0.000000e+00> : vector<8x8xf32>
    %14 = tpu.matmul %11, %5, %cst_12 {dimension_numbers = #tpu.dot_dimension_numbers<[1], [0], [0], [1], [0, 0, 1, 1], [], []>} : vector<8x8xf32>, vector<8x8xf32>, vector<8x8xf32> -> vector<8x8xf32>
    %15 = tpu.reciprocal %13 {approx = true} : vector<8x1xf32> -> vector<8x1xf32>
    %16 = vector.broadcast %15 : vector<8x1xf32> to vector<8x8xf32>
    %17 = arith.mulf %14, %16 : vector<8x8xf32>
    %c0_13 = arith.constant 0 : index
    %c0_14 = arith.constant 0 : index
    %18 = vector.load %arg7[%c0_13, %c0_14] : memref<8x32xf32, #tpu.memory_space<vmem>>, vector<8x8xf32>
    tpu.vector_store %arg7[%c0_13, %c0_14], %17 {strides = array<i32>} : memref<8x32xf32, #tpu.memory_space<vmem>>, vector<8x8xf32>,
    %c0_15 = arith.constant 0 : index
    %c0_16 = arith.constant 0 : index
    %c0_17 = arith.constant 0 : index
    %c8 = arith.constant 8 : index
    %19 = vector.load %arg2[%c0_15, %c0_16, %c0_17, %c8] : memref<1x1x8x32xf32, #tpu.memory_space<vmem>>, vector<1x1x8x8xf32>
    %20 = vector.shape_cast %19 : vector<1x1x8x8xf32> to vector<8x8xf32>
    %c0_18 = arith.constant 0 : index
    %c0_19 = arith.constant 0 : index
    %c0_20 = arith.constant 0 : index
    %c8_21 = arith.constant 8 : index
    %21 = vector.load %arg3[%c0_18, %c0_19, %c0_20, %c8_21] : memref<1x1x8x64xf32, #tpu.memory_space<vmem>>, vector<1x1x8x8xf32>
    %22 = vector.shape_cast %21 : vector<1x1x8x8xf32> to vector<8x8xf32>
    %c0_22 = arith.constant 0 : index
    %c0_23 = arith.constant 0 : index
    %c0_24 = arith.constant 0 : index
    %c40 = arith.constant 40 : index
    %23 = vector.load %arg3[%c0_22, %c0_23, %c0_24, %c40] : memref<1x1x8x64xf32, #tpu.memory_space<vmem>>, vector<1x1x8x8xf32>
    %24 = vector.shape_cast %23 : vector<1x1x8x8xf32> to vector<8x8xf32>
    %cst_25 = arith.constant dense<0.000000e+00> : vector<8x8xf32>
    %25 = tpu.matmul %20, %22, %cst_25 {dimension_numbers = #tpu.dot_dimension_numbers<[1], [1], [0], [0], [0, 0, 1, 0], [], []>} : vector<8x8xf32>, vector<8x8xf32>, vector<8x8xf32> -> vector<8x8xf32>
    %cst_26 = arith.constant dense<0xFF800000> : vector<8xf32>
    %26 = vector.multi_reduction <maximumf>, %25, %cst_26 [1] : vector<8x8xf32> to vector<8xf32>
    %27 = vector.shape_cast %26 : vector<8xf32> to vector<8x1xf32>
    %28 = vector.broadcast %27 : vector<8x1xf32> to vector<8x8xf32>
    %29 = arith.subf %25, %28 : vector<8x8xf32>
    %30 = math.exp %29 : vector<8x8xf32>
    %cst_27 = arith.constant dense<0.000000e+00> : vector<8xf32>
    %31 = vector.multi_reduction <add>, %30, %cst_27 [1] : vector<8x8xf32> to vector<8xf32>
    %32 = vector.shape_cast %31 : vector<8xf32> to vector<8x1xf32>
    %cst_28 = arith.constant dense<0.000000e+00> : vector<8x8xf32>
    %33 = tpu.matmul %30, %24, %cst_28 {dimension_numbers = #tpu.dot_dimension_numbers<[1], [0], [0], [1], [0, 0, 1, 1], [], []>} : vector<8x8xf32>, vector<8x8xf32>, vector<8x8xf32> -> vector<8x8xf32>
    %34 = tpu.reciprocal %32 {approx = true} : vector<8x1xf32> -> vector<8x1xf32>
    %35 = vector.broadcast %34 : vector<8x1xf32> to vector<8x8xf32>
    %36 = arith.mulf %33, %35 : vector<8x8xf32>
    %c0_29 = arith.constant 0 : index
    %c8_30 = arith.constant 8 : index
    %37 = vector.load %arg7[%c0_29, %c8_30] : memref<8x32xf32, #tpu.memory_space<vmem>>, vector<8x8xf32>
    tpu.vector_store %arg7[%c0_29, %c8_30], %36 {strides = array<i32>} : memref<8x32xf32, #tpu.memory_space<vmem>>, vector<8x8xf32>,
    %c0_31 = arith.constant 0 : index
    %c0_32 = arith.constant 0 : index
    %c0_33 = arith.constant 0 : index
    %c16 = arith.constant 16 : index
    %38 = vector.load %arg2[%c0_31, %c0_32, %c0_33, %c16] : memref<1x1x8x32xf32, #tpu.memory_space<vmem>>, vector<1x1x8x8xf32>
    %39 = vector.shape_cast %38 : vector<1x1x8x8xf32> to vector<8x8xf32>
    %c0_34 = arith.constant 0 : index
    %c0_35 = arith.constant 0 : index
    %c0_36 = arith.constant 0 : index
    %c16_37 = arith.constant 16 : index
    %40 = vector.load %arg3[%c0_34, %c0_35, %c0_36, %c16_37] : memref<1x1x8x64xf32, #tpu.memory_space<vmem>>, vector<1x1x8x8xf32>
    %41 = vector.shape_cast %40 : vector<1x1x8x8xf32> to vector<8x8xf32>
    %c0_38 = arith.constant 0 : index
    %c0_39 = arith.constant 0 : index
    %c0_40 = arith.constant 0 : index
    %c48 = arith.constant 48 : index
    %42 = vector.load %arg3[%c0_38, %c0_39, %c0_40, %c48] : memref<1x1x8x64xf32, #tpu.memory_space<vmem>>, vector<1x1x8x8xf32>
    %43 = vector.shape_cast %42 : vector<1x1x8x8xf32> to vector<8x8xf32>
    %cst_41 = arith.constant dense<0.000000e+00> : vector<8x8xf32>
    %44 = tpu.matmul %39, %41, %cst_41 {dimension_numbers = #tpu.dot_dimension_numbers<[1], [1], [0], [0], [0, 0, 1, 0], [], []>} : vector<8x8xf32>, vector<8x8xf32>, vector<8x8xf32> -> vector<8x8xf32>
    %cst_42 = arith.constant dense<0xFF800000> : vector<8xf32>
    %45 = vector.multi_reduction <maximumf>, %44, %cst_42 [1] : vector<8x8xf32> to vector<8xf32>
    %46 = vector.shape_cast %45 : vector<8xf32> to vector<8x1xf32>
    %47 = vector.broadcast %46 : vector<8x1xf32> to vector<8x8xf32>
    %48 = arith.subf %44, %47 : vector<8x8xf32>
    %49 = math.exp %48 : vector<8x8xf32>
    %cst_43 = arith.constant dense<0.000000e+00> : vector<8xf32>
    %50 = vector.multi_reduction <add>, %49, %cst_43 [1] : vector<8x8xf32> to vector<8xf32>
    %51 = vector.shape_cast %50 : vector<8xf32> to vector<8x1xf32>
    %cst_44 = arith.constant dense<0.000000e+00> : vector<8x8xf32>
    %52 = tpu.matmul %49, %43, %cst_44 {dimension_numbers = #tpu.dot_dimension_numbers<[1], [0], [0], [1], [0, 0, 1, 1], [], []>} : vector<8x8xf32>, vector<8x8xf32>, vector<8x8xf32> -> vector<8x8xf32>
    %53 = tpu.reciprocal %51 {approx = true} : vector<8x1xf32> -> vector<8x1xf32>
    %54 = vector.broadcast %53 : vector<8x1xf32> to vector<8x8xf32>
    %55 = arith.mulf %52, %54 : vector<8x8xf32>
    %c0_45 = arith.constant 0 : index
    %c16_46 = arith.constant 16 : index
    %56 = vector.load %arg7[%c0_45, %c16_46] : memref<8x32xf32, #tpu.memory_space<vmem>>, vector<8x8xf32>
    tpu.vector_store %arg7[%c0_45, %c16_46], %55 {strides = array<i32>} : memref<8x32xf32, #tpu.memory_space<vmem>>, vector<8x8xf32>,
    %c0_47 = arith.constant 0 : index
    %c0_48 = arith.constant 0 : index
    %c0_49 = arith.constant 0 : index
    %c24 = arith.constant 24 : index
    %57 = vector.load %arg2[%c0_47, %c0_48, %c0_49, %c24] : memref<1x1x8x32xf32, #tpu.memory_space<vmem>>, vector<1x1x8x8xf32>
    %58 = vector.shape_cast %57 : vector<1x1x8x8xf32> to vector<8x8xf32>
    %c0_50 = arith.constant 0 : index
    %c0_51 = arith.constant 0 : index
    %c0_52 = arith.constant 0 : index
    %c24_53 = arith.constant 24 : index
    %59 = vector.load %arg3[%c0_50, %c0_51, %c0_52, %c24_53] : memref<1x1x8x64xf32, #tpu.memory_space<vmem>>, vector<1x1x8x8xf32>
    %60 = vector.shape_cast %59 : vector<1x1x8x8xf32> to vector<8x8xf32>
    %c0_54 = arith.constant 0 : index
    %c0_55 = arith.constant 0 : index
    %c0_56 = arith.constant 0 : index
    %c56 = arith.constant 56 : index
    %61 = vector.load %arg3[%c0_54, %c0_55, %c0_56, %c56] : memref<1x1x8x64xf32, #tpu.memory_space<vmem>>, vector<1x1x8x8xf32>
    %62 = vector.shape_cast %61 : vector<1x1x8x8xf32> to vector<8x8xf32>
    %cst_57 = arith.constant dense<0.000000e+00> : vector<8x8xf32>
    %63 = tpu.matmul %58, %60, %cst_57 {dimension_numbers = #tpu.dot_dimension_numbers<[1], [1], [0], [0], [0, 0, 1, 0], [], []>} : vector<8x8xf32>, vector<8x8xf32>, vector<8x8xf32> -> vector<8x8xf32>
    %cst_58 = arith.constant dense<0xFF800000> : vector<8xf32>
    %64 = vector.multi_reduction <maximumf>, %63, %cst_58 [1] : vector<8x8xf32> to vector<8xf32>
    %65 = vector.shape_cast %64 : vector<8xf32> to vector<8x1xf32>
    %66 = vector.broadcast %65 : vector<8x1xf32> to vector<8x8xf32>
    %67 = arith.subf %63, %66 : vector<8x8xf32>
    %68 = math.exp %67 : vector<8x8xf32>
    %cst_59 = arith.constant dense<0.000000e+00> : vector<8xf32>
    %69 = vector.multi_reduction <add>, %68, %cst_59 [1] : vector<8x8xf32> to vector<8xf32>
    %70 = vector.shape_cast %69 : vector<8xf32> to vector<8x1xf32>
    %cst_60 = arith.constant dense<0.000000e+00> : vector<8x8xf32>
    %71 = tpu.matmul %68, %62, %cst_60 {dimension_numbers = #tpu.dot_dimension_numbers<[1], [0], [0], [1], [0, 0, 1, 1], [], []>} : vector<8x8xf32>, vector<8x8xf32>, vector<8x8xf32> -> vector<8x8xf32>
    %72 = tpu.reciprocal %70 {approx = true} : vector<8x1xf32> -> vector<8x1xf32>
    %73 = vector.broadcast %72 : vector<8x1xf32> to vector<8x8xf32>
    %74 = arith.mulf %71, %73 : vector<8x8xf32>
    %c0_61 = arith.constant 0 : index
    %c24_62 = arith.constant 24 : index
    %75 = vector.load %arg7[%c0_61, %c24_62] : memref<8x32xf32, #tpu.memory_space<vmem>>, vector<8x8xf32>
    tpu.vector_store %arg7[%c0_61, %c24_62], %74 {strides = array<i32>} : memref<8x32xf32, #tpu.memory_space<vmem>>, vector<8x8xf32>,
    %c0_63 = arith.constant 0 : index
    %c0_64 = arith.constant 0 : index
    %76 = vector.load %arg7[%c0_63, %c0_64] : memref<8x32xf32, #tpu.memory_space<vmem>>, vector<8x32xf32>
    %c0_65 = arith.constant 0 : index
    %c0_66 = arith.constant 0 : index
    %77 = vector.load %arg4[%c0_65, %c0_66] : memref<32x32xf32, #tpu.memory_space<vmem>>, vector<32x32xf32>
    %cst_67 = arith.constant dense<0.000000e+00> : vector<8x32xf32>
    %78 = tpu.matmul %76, %77, %cst_67 {dimension_numbers = #tpu.dot_dimension_numbers<[1], [0], [0], [1], [0, 0, 1, 1], [], []>} : vector<8x32xf32>, vector<32x32xf32>, vector<8x32xf32> -> vector<8x32xf32>
    %c0_68 = arith.constant 0 : index
    %c0_69 = arith.constant 0 : index
    %79 = vector.load %arg5[%c0_68, %c0_69] : memref<1x32xf32, #tpu.memory_space<vmem>>, vector<1x32xf32>
    %80 = vector.broadcast %79 : vector<1x32xf32> to vector<8x32xf32>
    %81 = arith.addf %78, %80 : vector<8x32xf32>
    %c0_70 = arith.constant 0 : index
    %c0_71 = arith.constant 0 : index
    %c0_72 = arith.constant 0 : index
    %c0_73 = arith.constant 0 : index
    %82 = vector.load %arg6[%c0_70, %c0_71, %c0_72, %c0_73] : memref<1x1x8x32xf32, #tpu.memory_space<vmem>>, vector<1x1x8x32xf32>
    %83 = vector.shape_cast %82 : vector<1x1x8x32xf32> to vector<8x32xf32>
    %84 = vector.shape_cast %81 : vector<8x32xf32> to vector<1x1x8x32xf32>
    tpu.vector_store %arg6[%c0_70, %c0_71, %c0_72, %c0_73], %84 {strides = array<i32>} : memref<1x1x8x32xf32, #tpu.memory_space<vmem>>, vector<1x1x8x32xf32>,
    return
  }
  func.func @transform_0(%arg0: i32, %arg1: i32) -> (i32, i32, i32, i32) {
    %c0_i32 = arith.constant 0 : i32
    %c0_i32_0 = arith.constant 0 : i32
    %c0_i32_1 = arith.constant 0 : i32
    return %arg0, %arg1, %c0_i32, %c0_i32_0 : i32, i32, i32, i32
  }
  func.func @transform_1(%arg0: i32, %arg1: i32) -> (i32, i32, i32, i32) {
    %c1_i32 = arith.constant 1 : i32
    %0 = arith.subi %c1_i32, %arg0 : i32
    %c0_i32 = arith.constant 0 : i32
    %c0_i32_0 = arith.constant 0 : i32
    %c0_i32_1 = arith.constant 0 : i32
    return %0, %arg1, %c0_i32, %c0_i32_0 : i32, i32, i32, i32
  }
  func.func @transform_2(%arg0: i32, %arg1: i32) -> (i32, i32) {
    %c0_i32 = arith.constant 0 : i32
    %c0_i32_0 = arith.constant 0 : i32
    %c0_i32_1 = arith.constant 0 : i32
    return %c0_i32, %c0_i32_0 : i32, i32
  }
  func.func @transform_3(%arg0: i32, %arg1: i32) -> (i32, i32) {
    %c0_i32 = arith.constant 0 : i32
    %c0_i32_0 = arith.constant 0 : i32
    %c0_i32_1 = arith.constant 0 : i32
    return %c0_i32, %c0_i32_0 : i32, i32
  }
  func.func @transform_4(%arg0: i32, %arg1: i32) -> (i32, i32, i32, i32) {
    %c0_i32 = arith.constant 0 : i32
    %c0_i32_0 = arith.constant 0 : i32
    %c0_i32_1 = arith.constant 0 : i32
    return %arg0, %arg1, %c0_i32, %c0_i32_0 : i32, i32, i32, i32
  }
}

</mosaic_0001>

<llo_original>
// kernel: cross_modal_attention_fwd.3
$region0: #{cross_modal_attention_fwd.3}
  #allocation0 [shape = 'u32[]', space=smem, size = 0x4, offset = 0x4, fixed_abs, tag = 'smem constant byte address 0x4 - core index']
  #allocation1 [shape = 'u32[144,128]{1,0:T(1,128)}', space=vmem, size = 0x12000, scoped, tag = 'internal scratch']
  #allocation2 [shape = 'f32[32,32]{1,0:T(8,128)}', space=vmem, size = 0x4000, scoped, tag = 'scratch operand']
  %s0 = inlined_call_operand.vmem [shape: f32[32,32], index: 0, kind: input, shape index: {}]
  %s1 = inlined_call_operand.vmem [shape: f32[32,32], index: 1, kind: input, shape index: {}]
  %s2 = inlined_call_operand.vmem [shape: f32[1,32], index: 2, kind: input, shape index: {}]
  %s3 = inlined_call_operand.vmem [shape: f32[32,32], index: 3, kind: output, shape index: {}]
  %s4 = sld [smem:[#allocation0]]
  $region30: #{cross_modal_attention_fwd.3} parent=0
    _
  %s6 = ssub.s32 1, %s4
  %s7 = scalar_select 0, %s6, %s4
  // Predicated region
  $region2: #{cross_modal_attention_fwd.3} parent=0 // pred_check
    _
  $region3: #{cross_modal_attention_fwd.3} parent=0 // pred_check_branch
    %9 = sbr.rel (0) target = $region5
  $region4: #{cross_modal_attention_fwd.3} parent=0 // pred_region
    _
  $region5: #{cross_modal_attention_fwd.3} parent=0 // pred_fallthru
    _
  // Predicated region
  $region6: #{cross_modal_attention_fwd.3} parent=0 // pred_check
    _
  $region7: #{cross_modal_attention_fwd.3} parent=0 // pred_check_branch
    %11 = sbr.rel (0) target = $region9
  $region8: #{cross_modal_attention_fwd.3} parent=0 // pred_region
    _
  $region9: #{cross_modal_attention_fwd.3} parent=0 // pred_fallthru
    _
  // Predicated region
  $region10: #{cross_modal_attention_fwd.3} parent=0 // pred_check
    _
  $region11: #{cross_modal_attention_fwd.3} parent=0 // pred_check_branch
    %13 = sbr.rel (0) target = $region13
  $region12: #{cross_modal_attention_fwd.3} parent=0 // pred_region
    _
  $region13: #{cross_modal_attention_fwd.3} parent=0 // pred_fallthru
    _
  %p14 = scmp.eq.s32.totalorder 0, 0
  // Predicated region
  $region14: #{cross_modal_attention_fwd.3} parent=0 // pred_check
    %p15 = pneg %p14
  $region15: #{cross_modal_attention_fwd.3} parent=0 // pred_check_branch
    %17 = sbr.rel (%p15) target = $region17
  $region16: #{cross_modal_attention_fwd.3} parent=0 // pred_region
    %vm18 = vcmask 261120
    %19 = vst.msk [vmem:[#allocation2] sm:$0xff] %vm18, 0.0
    %20 = vst.msk [vmem:[#allocation2 + $0x8] sm:$0xff] %vm18, 0.0
    %21 = vst.msk [vmem:[#allocation2 + $0x10] sm:$0xff] %vm18, 0.0
    %22 = vst.msk [vmem:[#allocation2 + $0x18] sm:$0xff] %vm18, 0.0
  $region17: #{cross_modal_attention_fwd.3} parent=0 // pred_fallthru
    _
  %v23 = vld [vmem:[#allocation2] sm:$0xff]
  %v24 = vld [vmem:[#allocation2 + $0x8] sm:$0xff]
  %v25 = vld [vmem:[#allocation2 + $0x10] sm:$0xff]
  %v26 = vld [vmem:[#allocation2 + $0x18] sm:$0xff]
  %v27 = vld [vmem:[%s0] sm:$0xff]
  %v28 = vld [vmem:[%s0 + $0x8] sm:$0xff]
  %v29 = vld [vmem:[%s0 + $0x10] sm:$0xff]
  %v30 = vld [vmem:[%s0 + $0x18] sm:$0xff]
  %v31 = vld [vmem:[%s1] sm:$0xff]
  %v32 = vld [vmem:[%s1 + $0x8] sm:$0xff]
  %v33 = vld [vmem:[%s1 + $0x10] sm:$0xff]
  %v34 = vld [vmem:[%s1 + $0x18] sm:$0xff]
  %vm35 = vcmask 261120
  %v37 = vsel %vm35, %v27, 0
  %v40 = vsel %vm35, %v28, 0
  %v43 = vsel %vm35, %v29, 0
  %v46 = vsel %vm35, %v30, 0
  %48 = vmatprep.subr.mxu0 0.0
  %49 = vmatpush1.msra.mxu0 %v31
  %50 = vmatprep.subr.mxu0 0.0
  %51 = vmatpush1.msra.mxu0 %v32
  %52 = vmatprep.subr.mxu0 0.0
  %53 = vmatpush1.msra.mxu0 %v33
  %54 = vmatprep.subr.mxu0 0.0
  %55 = vmatpush1.msra.mxu0 %v34
  %56 = vmatprep.subr.mxu0 0.0
  %57 = vmatpush1.msra.mxu0 0.0
  %58 = vmatprep.subr.mxu0 0.0
  %59 = vmatpush1.msra.mxu0 0.0
  %60 = vmatprep.subr.mxu0 0.0
  %61 = vmatpush1.msra.mxu0 0.0
  %62 = vmatprep.subr.mxu0 0.0
  %63 = vmatpush1.msra.mxu0 0.0
  %64 = vmatprep.subr.mxu0 0.0
  %65 = vmatpush1.msra.mxu0 0.0
  %66 = vmatprep.subr.mxu0 0.0
  %67 = vmatpush1.msra.mxu0 0.0
  %68 = vmatprep.subr.mxu0 0.0
  %69 = vmatpush1.msra.mxu0 0.0
  %70 = vmatprep.subr.mxu0 0.0
  %71 = vmatpush1.msra.mxu0 0.0
  %72 = vmatprep.subr.mxu0 0.0
  %73 = vmatpush1.msra.mxu0 0.0
  %74 = vmatprep.subr.mxu0 0.0
  %75 = vmatpush1.msra.mxu0 0.0
  %76 = vmatprep.subr.mxu0 0.0
  %77 = vmatpush1.msra.mxu0 0.0
  %78 = vmatprep.subr.mxu0 0.0
  %79 = vmatpush1.msra.mxu0 0.0
  %80 = vmatprep.subr.mxu0 0.0
  %81 = vmatpush1.msra.mxu0 0.0
  %82 = vmatprep.subr.mxu0 0.0
  %83 = vmatpush1.msra.mxu0 0.0
  %84 = vmatprep.subr.mxu0 0.0
  %85 = vmatpush1.msra.mxu0 0.0
  %86 = vmatprep.subr.mxu0 0.0
  %87 = vmatpush1.msra.mxu0 0.0
  %88 = vmatprep.subr.mxu0 0.0
  %89 = vmatpush1.msra.mxu0 0.0
  %90 = vmatprep.subr.mxu0 0.0
  %91 = vmatpush1.msra.mxu0 0.0
  %92 = vmatprep.subr.mxu0 0.0
  %93 = vmatpush1.msra.mxu0 0.0
  %94 = vmatprep.subr.mxu0 0.0
  %95 = vmatpush1.msra.mxu0 0.0
  %96 = vmatprep.subr.mxu0 0.0
  %97 = vmatpush1.msra.mxu0 0.0
  %98 = vmatprep.subr.mxu0 0.0
  %99 = vmatpush1.msra.mxu0 0.0
  %100 = vmatprep.subr.mxu0 0.0
  %101 = vmatpush1.msra.mxu0 0.0
  %102 = vmatprep.subr.mxu0 0.0
  %103 = vmatpush1.msra.mxu0 0.0
  %104 = vmatprep.subr.mxu0 0.0
  %105 = vmatpush1.msra.mxu0 0.0
  %106 = vmatprep.subr.mxu0 0.0
  %107 = vmatpush1.msra.mxu0 0.0
  %108 = vmatprep.subr.mxu0 0.0
  %109 = vmatpush1.msra.mxu0 0.0
  %110 = vmatprep.subr.mxu0 0.0
  %111 = vmatpush1.msra.mxu0 0.0
  %112 = vmatprep.mubr.f32.mxu0 0.0
  %113 = vmatmul.mubr.f32.gmra.mrb[0].mxu0 %v37
  %v114 = vpop.f32.mrb[0].mxu0
  %v115 = vadd.f32 0.0, %v114
  %v116 = vpop.f32.mrb[0].mxu0
  %117 = vmatprep.mubr.f32.mxu0 0.0
  %118 = vmatmul.mubr.f32.gmra.mrb[0].mxu0 %v40
  %v119 = vpop.f32.mrb[0].mxu0
  %v120 = vadd.f32 0.0, %v119
  %v121 = vpop.f32.mrb[0].mxu0
  %122 = vmatprep.mubr.f32.mxu0 0.0
  %123 = vmatmul.mubr.f32.gmra.mrb[0].mxu0 %v43
  %v124 = vpop.f32.mrb[0].mxu0
  %v125 = vadd.f32 0.0, %v124
  %v126 = vpop.f32.mrb[0].mxu0
  %127 = vmatprep.mubr.f32.mxu0 0.0
  %128 = vmatmul.mubr.f32.gmra.mrb[0].mxu0 %v46
  %v129 = vpop.f32.mrb[0].mxu0
  %v130 = vadd.f32 0.0, %v129
  %v131 = vpop.f32.mrb[0].mxu0
  %132 = vdwg.mxu0
  %v133 = vadd.f32 %v23, %v115
  %v134 = vadd.f32 %v24, %v120
  %v135 = vadd.f32 %v25, %v125
  %v136 = vadd.f32 %v26, %v130
  %137 = vst.msk [vmem:[#allocation2] sm:$0xff] %vm35, %v133
  %138 = vst.msk [vmem:[#allocation2 + $0x8] sm:$0xff] %vm35, %v134
  %139 = vst.msk [vmem:[#allocation2 + $0x10] sm:$0xff] %vm35, %v135
  %140 = vst.msk [vmem:[#allocation2 + $0x18] sm:$0xff] %vm35, %v136
  // Predicated region
  $region18: #{cross_modal_attention_fwd.3} parent=0 // pred_check
    %p141 = pneg %p14
  $region19: #{cross_modal_attention_fwd.3} parent=0 // pred_check_branch
    %143 = sbr.rel (%p141) target = $region21
  $region20: #{cross_modal_attention_fwd.3} parent=0 // pred_region
    %v144 = vld [vmem:[#allocation2] sm:$0xff]
    %v145 = vld [vmem:[#allocation2 + $0x8] sm:$0xff]
    %v146 = vld [vmem:[#allocation2 + $0x10] sm:$0xff]
    %v147 = vld [vmem:[#allocation2 + $0x18] sm:$0xff]
    %v148 = vld [vmem:[%s2] sm:$0x1]
    %v150 = vlaneseq
    %v151 = vshrl.u32 %v150, 7
    %v152 = vsub.s32 0, %v151
    %v153 = vrot.slane %v148, %v152
    %v155 = vadd.f32 %v144, %v153
    %v156 = vadd.f32 %v145, %v153
    %v157 = vadd.f32 %v146, %v153
    %v158 = vadd.f32 %v147, %v153
    %159 = vst.msk [vmem:[%s3] sm:$0xff] %vm35, %v155
    %160 = vst.msk [vmem:[%s3 + $0x8] sm:$0xff] %vm35, %v156
    %161 = vst.msk [vmem:[%s3 + $0x10] sm:$0xff] %vm35, %v157
    %162 = vst.msk [vmem:[%s3 + $0x18] sm:$0xff] %vm35, %v158
  $region21: #{cross_modal_attention_fwd.3} parent=0 // pred_fallthru
    _
  // Predicated region
  $region22: #{cross_modal_attention_fwd.3} parent=0 // pred_check
    _
  $region23: #{cross_modal_attention_fwd.3} parent=0 // pred_check_branch
    %164 = sbr.rel (0) target = $region25
  $region24: #{cross_modal_attention_fwd.3} parent=0 // pred_region
    _
  $region25: #{cross_modal_attention_fwd.3} parent=0 // pred_fallthru
    _
  // Predicated region
  $region26: #{cross_modal_attention_fwd.3} parent=0 // pred_check
    _
  $region27: #{cross_modal_attention_fwd.3} parent=0 // pred_check_branch
    %166 = sbr.rel (0) target = $region29
  $region28: #{cross_modal_attention_fwd.3} parent=0 // pred_region
    _
  $region29: #{cross_modal_attention_fwd.3} parent=0 // pred_fallthru
    _

// kernel: cross_modal_attention_fwd.4
$region0: #{cross_modal_attention_fwd.4}
  #allocation0 [shape = 'u32[]', space=smem, size = 0x4, offset = 0x4, fixed_abs, tag = 'smem constant byte address 0x4 - core index']
  #allocation1 [shape = 'u32[144,128]{1,0:T(1,128)}', space=vmem, size = 0x12000, scoped, tag = 'internal scratch']
  #allocation2 [shape = 'f32[32,64]{1,0:T(8,128)}', space=vmem, size = 0x4000, scoped, tag = 'scratch operand']
  %s0 = inlined_call_operand.vmem [shape: f32[32,32], index: 0, kind: input, shape index: {}]
  %s1 = inlined_call_operand.vmem [shape: f32[32,64], index: 1, kind: input, shape index: {}]
  %s2 = inlined_call_operand.vmem [shape: f32[1,64], index: 2, kind: input, shape index: {}]
  %s3 = inlined_call_operand.vmem [shape: f32[32,64], index: 3, kind: output, shape index: {}]
  %s4 = sld [smem:[#allocation0]]
  $region30: #{cross_modal_attention_fwd.4} parent=0
    _
  %s6 = ssub.s32 1, %s4
  %s7 = scalar_select 0, %s6, %s4
  // Predicated region
  $region2: #{cross_modal_attention_fwd.4} parent=0 // pred_check
    _
  $region3: #{cross_modal_attention_fwd.4} parent=0 // pred_check_branch
    %9 = sbr.rel (0) target = $region5
  $region4: #{cross_modal_attention_fwd.4} parent=0 // pred_region
    _
  $region5: #{cross_modal_attention_fwd.4} parent=0 // pred_fallthru
    _
  // Predicated region
  $region6: #{cross_modal_attention_fwd.4} parent=0 // pred_check
    _
  $region7: #{cross_modal_attention_fwd.4} parent=0 // pred_check_branch
    %11 = sbr.rel (0) target = $region9
  $region8: #{cross_modal_attention_fwd.4} parent=0 // pred_region
    _
  $region9: #{cross_modal_attention_fwd.4} parent=0 // pred_fallthru
    _
  // Predicated region
  $region10: #{cross_modal_attention_fwd.4} parent=0 // pred_check
    _
  $region11: #{cross_modal_attention_fwd.4} parent=0 // pred_check_branch
    %13 = sbr.rel (0) target = $region13
  $region12: #{cross_modal_attention_fwd.4} parent=0 // pred_region
    _
  $region13: #{cross_modal_attention_fwd.4} parent=0 // pred_fallthru
    _
  %p14 = scmp.eq.s32.totalorder 0, 0
  // Predicated region
  $region14: #{cross_modal_attention_fwd.4} parent=0 // pred_check
    %p15 = pneg %p14
  $region15: #{cross_modal_attention_fwd.4} parent=0 // pred_check_branch
    %17 = sbr.rel (%p15) target = $region17
  $region16: #{cross_modal_attention_fwd.4} parent=0 // pred_region
    %vm18 = vcmask 523264
    %19 = vst.msk [vmem:[#allocation2] sm:$0xff] %vm18, 0.0
    %20 = vst.msk [vmem:[#allocation2 + $0x8] sm:$0xff] %vm18, 0.0
    %21 = vst.msk [vmem:[#allocation2 + $0x10] sm:$0xff] %vm18, 0.0
    %22 = vst.msk [vmem:[#allocation2 + $0x18] sm:$0xff] %vm18, 0.0
  $region17: #{cross_modal_attention_fwd.4} parent=0 // pred_fallthru
    _
  %v23 = vld [vmem:[#allocation2] sm:$0xff]
  %v24 = vld [vmem:[#allocation2 + $0x8] sm:$0xff]
  %v25 = vld [vmem:[#allocation2 + $0x10] sm:$0xff]
  %v26 = vld [vmem:[#allocation2 + $0x18] sm:$0xff]
  %v27 = vld [vmem:[%s0] sm:$0xff]
  %v28 = vld [vmem:[%s0 + $0x8] sm:$0xff]
  %v29 = vld [vmem:[%s0 + $0x10] sm:$0xff]
  %v30 = vld [vmem:[%s0 + $0x18] sm:$0xff]
  %v31 = vld [vmem:[%s1] sm:$0xff]
  %v32 = vld [vmem:[%s1 + $0x8] sm:$0xff]
  %v33 = vld [vmem:[%s1 + $0x10] sm:$0xff]
  %v34 = vld [vmem:[%s1 + $0x18] sm:$0xff]
  %vm35 = vcmask 261120
  %v37 = vsel %vm35, %v27, 0
  %v40 = vsel %vm35, %v28, 0
  %v43 = vsel %vm35, %v29, 0
  %v46 = vsel %vm35, %v30, 0
  %48 = vmatprep.subr.mxu0 0.0
  %49 = vmatpush1.msra.mxu0 %v31
  %50 = vmatprep.subr.mxu0 0.0
  %51 = vmatpush1.msra.mxu0 %v32
  %52 = vmatprep.subr.mxu0 0.0
  %53 = vmatpush1.msra.mxu0 %v33
  %54 = vmatprep.subr.mxu0 0.0
  %55 = vmatpush1.msra.mxu0 %v34
  %56 = vmatprep.subr.mxu0 0.0
  %57 = vmatpush1.msra.mxu0 0.0
  %58 = vmatprep.subr.mxu0 0.0
  %59 = vmatpush1.msra.mxu0 0.0
  %60 = vmatprep.subr.mxu0 0.0
  %61 = vmatpush1.msra.mxu0 0.0
  %62 = vmatprep.subr.mxu0 0.0
  %63 = vmatpush1.msra.mxu0 0.0
  %64 = vmatprep.subr.mxu0 0.0
  %65 = vmatpush1.msra.mxu0 0.0
  %66 = vmatprep.subr.mxu0 0.0
  %67 = vmatpush1.msra.mxu0 0.0
  %68 = vmatprep.subr.mxu0 0.0
  %69 = vmatpush1.msra.mxu0 0.0
  %70 = vmatprep.subr.mxu0 0.0
  %71 = vmatpush1.msra.mxu0 0.0
  %72 = vmatprep.subr.mxu0 0.0
  %73 = vmatpush1.msra.mxu0 0.0
  %74 = vmatprep.subr.mxu0 0.0
  %75 = vmatpush1.msra.mxu0 0.0
  %76 = vmatprep.subr.mxu0 0.0
  %77 = vmatpush1.msra.mxu0 0.0
  %78 = vmatprep.subr.mxu0 0.0
  %79 = vmatpush1.msra.mxu0 0.0
  %80 = vmatprep.subr.mxu0 0.0
  %81 = vmatpush1.msra.mxu0 0.0
  %82 = vmatprep.subr.mxu0 0.0
  %83 = vmatpush1.msra.mxu0 0.0
  %84 = vmatprep.subr.mxu0 0.0
  %85 = vmatpush1.msra.mxu0 0.0
  %86 = vmatprep.subr.mxu0 0.0
  %87 = vmatpush1.msra.mxu0 0.0
  %88 = vmatprep.subr.mxu0 0.0
  %89 = vmatpush1.msra.mxu0 0.0
  %90 = vmatprep.subr.mxu0 0.0
  %91 = vmatpush1.msra.mxu0 0.0
  %92 = vmatprep.subr.mxu0 0.0
  %93 = vmatpush1.msra.mxu0 0.0
  %94 = vmatprep.subr.mxu0 0.0
  %95 = vmatpush1.msra.mxu0 0.0
  %96 = vmatprep.subr.mxu0 0.0
  %97 = vmatpush1.msra.mxu0 0.0
  %98 = vmatprep.subr.mxu0 0.0
  %99 = vmatpush1.msra.mxu0 0.0
  %100 = vmatprep.subr.mxu0 0.0
  %101 = vmatpush1.msra.mxu0 0.0
  %102 = vmatprep.subr.mxu0 0.0
  %103 = vmatpush1.msra.mxu0 0.0
  %104 = vmatprep.subr.mxu0 0.0
  %105 = vmatpush1.msra.mxu0 0.0
  %106 = vmatprep.subr.mxu0 0.0
  %107 = vmatpush1.msra.mxu0 0.0
  %108 = vmatprep.subr.mxu0 0.0
  %109 = vmatpush1.msra.mxu0 0.0
  %110 = vmatprep.subr.mxu0 0.0
  %111 = vmatpush1.msra.mxu0 0.0
  %112 = vmatprep.mubr.f32.mxu0 0.0
  %113 = vmatmul.mubr.f32.gmra.mrb[0].mxu0 %v37
  %v114 = vpop.f32.mrb[0].mxu0
  %v115 = vadd.f32 0.0, %v114
  %v116 = vpop.f32.mrb[0].mxu0
  %117 = vmatprep.mubr.f32.mxu0 0.0
  %118 = vmatmul.mubr.f32.gmra.mrb[0].mxu0 %v40
  %v119 = vpop.f32.mrb[0].mxu0
  %v120 = vadd.f32 0.0, %v119
  %v121 = vpop.f32.mrb[0].mxu0
  %122 = vmatprep.mubr.f32.mxu0 0.0
  %123 = vmatmul.mubr.f32.gmra.mrb[0].mxu0 %v43
  %v124 = vpop.f32.mrb[0].mxu0
  %v125 = vadd.f32 0.0, %v124
  %v126 = vpop.f32.mrb[0].mxu0
  %127 = vmatprep.mubr.f32.mxu0 0.0
  %128 = vmatmul.mubr.f32.gmra.mrb[0].mxu0 %v46
  %v129 = vpop.f32.mrb[0].mxu0
  %v130 = vadd.f32 0.0, %v129
  %v131 = vpop.f32.mrb[0].mxu0
  %132 = vdwg.mxu0
  %v133 = vadd.f32 %v23, %v115
  %v134 = vadd.f32 %v24, %v120
  %v135 = vadd.f32 %v25, %v125
  %v136 = vadd.f32 %v26, %v130
  %vm137 = vcmask 523264
  %138 = vst.msk [vmem:[#allocation2] sm:$0xff] %vm137, %v133
  %139 = vst.msk [vmem:[#allocation2 + $0x8] sm:$0xff] %vm137, %v134
  %140 = vst.msk [vmem:[#allocation2 + $0x10] sm:$0xff] %vm137, %v135
  %141 = vst.msk [vmem:[#allocation2 + $0x18] sm:$0xff] %vm137, %v136
  // Predicated region
  $region18: #{cross_modal_attention_fwd.4} parent=0 // pred_check
    %p142 = pneg %p14
  $region19: #{cross_modal_attention_fwd.4} parent=0 // pred_check_branch
    %144 = sbr.rel (%p142) target = $region21
  $region20: #{cross_modal_attention_fwd.4} parent=0 // pred_region
    %v145 = vld [vmem:[#allocation2] sm:$0xff]
    %v146 = vld [vmem:[#allocation2 + $0x8] sm:$0xff]
    %v147 = vld [vmem:[#allocation2 + $0x10] sm:$0xff]
    %v148 = vld [vmem:[#allocation2 + $0x18] sm:$0xff]
    %v149 = vld [vmem:[%s2] sm:$0x1]
    %v151 = vlaneseq
    %v152 = vshrl.u32 %v151, 7
    %v153 = vsub.s32 0, %v152
    %v154 = vrot.slane %v149, %v153
    %v156 = vadd.f32 %v145, %v154
    %v157 = vadd.f32 %v146, %v154
    %v158 = vadd.f32 %v147, %v154
    %v159 = vadd.f32 %v148, %v154
    %160 = vst.msk [vmem:[%s3] sm:$0xff] %vm137, %v156
    %161 = vst.msk [vmem:[%s3 + $0x8] sm:$0xff] %vm137, %v157
    %162 = vst.msk [vmem:[%s3 + $0x10] sm:$0xff] %vm137, %v158
    %163 = vst.msk [vmem:[%s3 + $0x18] sm:$0xff] %vm137, %v159
  $region21: #{cross_modal_attention_fwd.4} parent=0 // pred_fallthru
    _
  // Predicated region
  $region22: #{cross_modal_attention_fwd.4} parent=0 // pred_check
    _
  $region23: #{cross_modal_attention_fwd.4} parent=0 // pred_check_branch
    %165 = sbr.rel (0) target = $region25
  $region24: #{cross_modal_attention_fwd.4} parent=0 // pred_region
    _
  $region25: #{cross_modal_attention_fwd.4} parent=0 // pred_fallthru
    _
  // Predicated region
  $region26: #{cross_modal_attention_fwd.4} parent=0 // pred_check
    _
  $region27: #{cross_modal_attention_fwd.4} parent=0 // pred_check_branch
    %167 = sbr.rel (0) target = $region29
  $region28: #{cross_modal_attention_fwd.4} parent=0 // pred_region
    _
  $region29: #{cross_modal_attention_fwd.4} parent=0 // pred_fallthru
    _

// kernel: cross_modal_attention_fwd.5
$region0: #{cross_modal_attention_fwd.5}
  #allocation0 [shape = 'u32[]', space=smem, size = 0x4, offset = 0x4, fixed_abs, tag = 'smem constant byte address 0x4 - core index']
  #allocation1 [shape = 'u32[144,128]{1,0:T(1,128)}', space=vmem, size = 0x12000, scoped, tag = 'internal scratch']
  #allocation2 [shape = 'f32[8,32]{1,0:T(8,128)}', space=vmem, size = 0x1000, scoped, tag = 'scratch operand']
  %s0 = inlined_call_operand.vmem [shape: f32[2,2,8,32], index: 0, kind: input, shape index: {}]
  %s1 = inlined_call_operand.vmem [shape: f32[2,2,8,64], index: 1, kind: input, shape index: {}]
  %s2 = inlined_call_operand.vmem [shape: f32[32,32], index: 2, kind: input, shape index: {}]
  %s3 = inlined_call_operand.vmem [shape: f32[1,32], index: 3, kind: input, shape index: {}]
  %s4 = inlined_call_operand.vmem [shape: f32[2,2,8,32], index: 4, kind: output, shape index: {}]
  %s5 = sld [smem:[#allocation0]]
  $region49: #{cross_modal_attention_fwd.5} parent=0
    _
  %s7 = ssub.s32 1, %s5
  %s8 = scalar_select 0, %s7, %s5
  loop: start=0, step=1, limit=6
  $region2: #{cross_modal_attention_fwd.5} parent=0 // loop_pre_header
    _
  $region3: #{cross_modal_attention_fwd.5} parent=0 // loop_header
    %s10 = sphi 0, %s14
    %p11 = scmp.ge.s32.totalorder %s10, 6
    %s17 = sphi 0, %s29
    %s18 = sphi 0, %s25
    %s19 = sphi 0, %s17
    %s20 = sphi 0, %s18
    %s21 = sphi 0, %s19
    %s22 = sphi 0, %s20
    %s34 = sphi 0, %s36
    %s37 = sphi 0, %s34
    %s38 = sphi 0, %s37
    %s54 = sphi 0, %s38
    %s64 = sphi 0, %s66
    %s67 = sphi 0, %s64
    %s68 = sphi 0, %s67
    %s84 = sphi 0, %s68
    %s88 = sphi 0, %s88
    %s90 = sphi 0, %s88
    %s91 = sphi 0, %s90
    %s105 = sphi 0, %s91
    %s109 = sphi 0, %s109
    %s111 = sphi 0, %s109
    %s112 = sphi 0, %s111
    %s126 = sphi 0, %s112
    %s134 = sphi 0, %s136
    %s137 = sphi 0, %s134
    %s138 = sphi 0, %s137
    %s154 = sphi 0, %s138
  $region4: #{cross_modal_attention_fwd.5} parent=0 // loop_header_branch
    %13 = sbr.rel (%p11) target = $region8
  $region5: #{cross_modal_attention_fwd.5} parent=0 // loop_body
    %s15 = ssub.s32 %s10, 1
    %s16 = ssub.s32 %s10, 2
    %s23 = sadd.s32 1, %s18
    %p24 = scmp.ge.s32.totalorder %s23, 2
    %s25 = scalar_select %p24, 0, %s23
    %s26 = sadd.s32 1, %s17
    %s27 = scalar_select %p24, %s26, %s17
    %p28 = scmp.ge.s32.totalorder %s27, 2
    %s29 = scalar_select %p28, 0, %s27
    %s30 = ssub.s32 %s17, %s29
    %s31 = ssub.s32 %s18, %s25
    %s32 = sor.u32 %s30, %s31
    %p33 = scmp.eq.s32.totalorder %s32, 0
    %s35 = sadd.s32 %s34, 1
    %s36 = scalar_select %p33, %s34, %s35
    %p39 = pneg %p33
    %p40 = scmp.eq.s32.totalorder %s10, 3
    %p41 = por %p39, %p40
    %p42 = scmp.ne.s32.totalorder %s34, %s37
    %p43 = scmp.eq.s32.totalorder %s10, 0
    %p44 = por %p42, %p43
    %p45 = scmp.ne.s32.totalorder %s34, %s37
    %p46 = scmp.eq.s32.totalorder %s15, 3
    %p47 = por %p45, %p46
    %p48 = scmp.ne.s32.totalorder %s37, %s38
    %p49 = scmp.eq.s32.totalorder %s15, 0
    %p50 = por %p48, %p49
    %p51 = scmp.ne.s32.totalorder %s37, %s38
    %p52 = scmp.eq.s32.totalorder %s16, 3
    %p53 = por %p51, %p52
    %p55 = scmp.ne.s32.totalorder %s38, %s54
    %p56 = scmp.eq.s32.totalorder %s16, 0
    %p57 = por %p55, %p56
    %s58 = ssub.s32 1, %s17
    %s59 = ssub.s32 1, %s29
    %s60 = ssub.s32 %s58, %s59
    %s61 = ssub.s32 %s18, %s25
    %s62 = sor.u32 %s60, %s61
    %p63 = scmp.eq.s32.totalorder %s62, 0
    %s65 = sadd.s32 %s64, 1
    %s66 = scalar_select %p63, %s64, %s65
    %p69 = pneg %p63
    %p70 = scmp.eq.s32.totalorder %s10, 3
    %p71 = por %p69, %p70
    %p72 = scmp.ne.s32.totalorder %s64, %s67
    %p73 = scmp.eq.s32.totalorder %s10, 0
    %p74 = por %p72, %p73
    %p75 = scmp.ne.s32.totalorder %s64, %s67
    %p76 = scmp.eq.s32.totalorder %s15, 3
    %p77 = por %p75, %p76
    %p78 = scmp.ne.s32.totalorder %s67, %s68
    %p79 = scmp.eq.s32.totalorder %s15, 0
    %p80 = por %p78, %p79
    %p81 = scmp.ne.s32.totalorder %s67, %s68
    %p82 = scmp.eq.s32.totalorder %s16, 3
    %p83 = por %p81, %p82
    %p85 = scmp.ne.s32.totalorder %s68, %s84
    %p86 = scmp.eq.s32.totalorder %s16, 0
    %p87 = por %p85, %p86
    %s89 = sadd.s32 %s88, 1
    %p92 = scmp.eq.s32.totalorder %s10, 3
    %p93 = scmp.ne.s32.totalorder %s88, %s90
    %p94 = scmp.eq.s32.totalorder %s10, 0
    %p95 = por %p93, %p94
    %p96 = scmp.ne.s32.totalorder %s88, %s90
    %p97 = scmp.eq.s32.totalorder %s15, 3
    %p98 = por %p96, %p97
    %p99 = scmp.ne.s32.totalorder %s90, %s91
    %p100 = scmp.eq.s32.totalorder %s15, 0
    %p101 = por %p99, %p100
    %p102 = scmp.ne.s32.totalorder %s90, %s91
    %p103 = scmp.eq.s32.totalorder %s16, 3
    %p104 = por %p102, %p103
    %p106 = scmp.ne.s32.totalorder %s91, %s105
    %p107 = scmp.eq.s32.totalorder %s16, 0
    %p108 = por %p106, %p107
    %s110 = sadd.s32 %s109, 1
    %p113 = scmp.eq.s32.totalorder %s10, 3
    %p114 = scmp.ne.s32.totalorder %s109, %s111
    %p115 = scmp.eq.s32.totalorder %s10, 0
    %p116 = por %p114, %p115
    %p117 = scmp.ne.s32.totalorder %s109, %s111
    %p118 = scmp.eq.s32.totalorder %s15, 3
    %p119 = por %p117, %p118
    %p120 = scmp.ne.s32.totalorder %s111, %s112
    %p121 = scmp.eq.s32.totalorder %s15, 0
    %p122 = por %p120, %p121
    %p123 = scmp.ne.s32.totalorder %s111, %s112
    %p124 = scmp.eq.s32.totalorder %s16, 3
    %p125 = por %p123, %p124
    %p127 = scmp.ne.s32.totalorder %s112, %s126
    %p128 = scmp.eq.s32.totalorder %s16, 0
    %p129 = por %p127, %p128
    %s130 = ssub.s32 %s17, %s29
    %s131 = ssub.s32 %s18, %s25
    %s132 = sor.u32 %s130, %s131
    %p133 = scmp.eq.s32.totalorder %s132, 0
    %s135 = sadd.s32 %s134, 1
    %s136 = scalar_select %p133, %s134, %s135
    %p139 = pneg %p133
    %p140 = scmp.eq.s32.totalorder %s10, 3
    %p141 = por %p139, %p140
    %p142 = scmp.ne.s32.totalorder %s134, %s137
    %p143 = scmp.eq.s32.totalorder %s10, 0
    %p144 = por %p142, %p143
    %p145 = scmp.ne.s32.totalorder %s134, %s137
    %p146 = scmp.eq.s32.totalorder %s15, 3
    %p147 = por %p145, %p146
    %p148 = scmp.ne.s32.totalorder %s137, %s138
    %p149 = scmp.eq.s32.totalorder %s15, 0
    %p150 = por %p148, %p149
    %p151 = scmp.ne.s32.totalorder %s137, %s138
    %p152 = scmp.eq.s32.totalorder %s16, 3
    %p153 = por %p151, %p152
    %p155 = scmp.ne.s32.totalorder %s138, %s154
    %p156 = scmp.eq.s32.totalorder %s16, 0
    %p157 = por %p155, %p156
    %p158 = scmp.le.s32.totalorder 1, %s10
    %p159 = scmp.lt.s32.totalorder %s10, 5
    %p160 = pnand %p158, %p159
    %p161 = pneg %p160
    // Predicated region
    $region9: #{cross_modal_attention_fwd.5} parent=5 // pred_check
      _
    $region10: #{cross_modal_attention_fwd.5} parent=5 // pred_check_branch
      %163 = sbr.rel (%p160) target = $region12
    $region11: #{cross_modal_attention_fwd.5} parent=5 // pred_region
      %s164 = ssub.s32 %s10, 1
      // Predicated region
      $region13: #{cross_modal_attention_fwd.5} parent=11 // pred_check
        %p165 = pneg %p101
      $region14: #{cross_modal_attention_fwd.5} parent=11 // pred_check_branch
        %167 = sbr.rel (%p165) target = $region16
      $region15: #{cross_modal_attention_fwd.5} parent=11 // pred_region
        _
      $region16: #{cross_modal_attention_fwd.5} parent=11 // pred_fallthru
        _
      // Predicated region
      $region17: #{cross_modal_attention_fwd.5} parent=11 // pred_check
        %p168 = pneg %p122
      $region18: #{cross_modal_attention_fwd.5} parent=11 // pred_check_branch
        %170 = sbr.rel (%p168) target = $region20
      $region19: #{cross_modal_attention_fwd.5} parent=11 // pred_region
        _
      $region20: #{cross_modal_attention_fwd.5} parent=11 // pred_fallthru
        _
    $region12: #{cross_modal_attention_fwd.5} parent=5 // pred_fallthru
      _
    %p171 = scmp.lt.s32.totalorder %s10, 4
    // Predicated region
    $region21: #{cross_modal_attention_fwd.5} parent=5 // pred_check
      %p172 = pneg %p171
    $region22: #{cross_modal_attention_fwd.5} parent=5 // pred_check_branch
      %174 = sbr.rel (%p172) target = $region24
    $region23: #{cross_modal_attention_fwd.5} parent=5 // pred_region
      // Predicated region
      $region25: #{cross_modal_attention_fwd.5} parent=23 // pred_check
        %p175 = pneg %p44
      $region26: #{cross_modal_attention_fwd.5} parent=23 // pred_check_branch
        %177 = sbr.rel (%p175) target = $region28
      $region27: #{cross_modal_attention_fwd.5} parent=23 // pred_region
        %p178 = scmp.lt.s32.totalorder %s17, 1
        %s179 = scalar_select %p178, %s17, 1
        %p180 = scmp.lt.s32.totalorder %s18, 1
        %s181 = scalar_select %p180, %s18, 1
        %s182 = smul.addr %s179, 2
        %s183 = sadd.s32 %s181, %s182
        %s184 = smul.addr %s183, 8
        %s185 = scalar_lea.vmem %s0, %s184
      $region28: #{cross_modal_attention_fwd.5} parent=23 // pred_fallthru
        _
      // Predicated region
      $region29: #{cross_modal_attention_fwd.5} parent=23 // pred_check
        %p186 = pneg %p74
      $region30: #{cross_modal_attention_fwd.5} parent=23 // pred_check_branch
        %188 = sbr.rel (%p186) target = $region32
      $region31: #{cross_modal_attention_fwd.5} parent=23 // pred_region
        %s189 = ssub.s32 1, %s17
        %p190 = scmp.lt.s32.totalorder %s189, 1
        %s191 = scalar_select %p190, %s189, 1
        %p192 = scmp.lt.s32.totalorder %s18, 1
        %s193 = scalar_select %p192, %s18, 1
        %s194 = smul.addr %s191, 2
        %s195 = sadd.s32 %s193, %s194
        %s196 = smul.addr %s195, 8
        %s197 = scalar_lea.vmem %s1, %s196
        %s198 = ssub.s32 1, %s17
      $region32: #{cross_modal_attention_fwd.5} parent=23 // pred_fallthru
        _
    $region24: #{cross_modal_attention_fwd.5} parent=5 // pred_fallthru
      _
    %p199 = scmp.le.s32.totalorder 1, %s10
    %p200 = scmp.lt.s32.totalorder %s10, 5
    %p201 = pnand %p199, %p200
    %p202 = pneg %p201
    // Predicated region
    $region33: #{cross_modal_attention_fwd.5} parent=5 // pred_check
      _
    $region34: #{cross_modal_attention_fwd.5} parent=5 // pred_check_branch
      %204 = sbr.rel (%p201) target = $region36
    $region35: #{cross_modal_attention_fwd.5} parent=5 // pred_region
      %s205 = ssub.s32 %s10, 1
      %p206 = scmp.lt.s32.totalorder %s19, 1
      %s207 = scalar_select %p206, %s19, 1
      %p208 = scmp.lt.s32.totalorder %s20, 1
      %s209 = scalar_select %p208, %s20, 1
      %s210 = smul.addr %s207, 2
      %s211 = sadd.s32 %s209, %s210
      %s212 = smul.addr %s211, 8
      %s213 = scalar_lea.vmem %s0, %s212
      %p214 = pneg %p50
      %p215 = pneg %p47
      %s216 = ssub.s32 1, %s19
      %p217 = scmp.lt.s32.totalorder %s216, 1
      %s218 = scalar_select %p217, %s216, 1
      %p219 = scmp.lt.s32.totalorder %s20, 1
      %s220 = scalar_select %p219, %s20, 1
      %s221 = smul.addr %s218, 2
      %s222 = sadd.s32 %s220, %s221
      %s223 = smul.addr %s222, 8
      %s224 = scalar_lea.vmem %s1, %s223
      %p225 = pneg %p80
      %p226 = pneg %p77
      %p227 = pneg %p101
      %p228 = pneg %p98
      %p229 = pneg %p122
      %p230 = pneg %p119
      %p231 = pneg %p150
      %p232 = pneg %p147
      %p233 = scmp.lt.s32.totalorder %s19, 1
      %s234 = scalar_select %p233, %s19, 1
      %p235 = scmp.lt.s32.totalorder %s20, 1
      %s236 = scalar_select %p235, %s20, 1
      %s237 = smul.addr %s234, 2
      %s238 = sadd.s32 %s236, %s237
      %s239 = smul.addr %s238, 8
      %s240 = scalar_lea.vmem %s4, %s239
      %p241 = scmp.lt.s32.totalorder %s19, 1
      %s242 = scalar_select %p241, %s19, 1
      %p243 = scmp.lt.s32.totalorder %s20, 1
      %s244 = scalar_select %p243, %s20, 1
      %s245 = smul.addr %s242, 2
      %s246 = sadd.s32 %s244, %s245
      %s247 = smul.addr %s246, 8
      %s248 = scalar_lea.vmem %s0, %s247
      %s249 = ssub.s32 1, %s19
      %p250 = scmp.lt.s32.totalorder %s249, 1
      %s251 = scalar_select %p250, %s249, 1
      %p252 = scmp.lt.s32.totalorder %s20, 1
      %s253 = scalar_select %p252, %s20, 1
      %s254 = smul.addr %s251, 2
      %s255 = sadd.s32 %s253, %s254
      %s256 = smul.addr %s255, 8
      %s257 = scalar_lea.vmem %s1, %s256
      %s258 = ssub.s32 1, %s19
      %p259 = scmp.lt.s32.totalorder %s19, 1
      %s260 = scalar_select %p259, %s19, 1
      %p261 = scmp.lt.s32.totalorder %s20, 1
      %s262 = scalar_select %p261, %s20, 1
      %s263 = smul.addr %s260, 2
      %s264 = sadd.s32 %s262, %s263
      %s265 = smul.addr %s264, 8
      %s266 = scalar_lea.vmem %s4, %s265
      %v267 = vld [vmem:[%s248] sm:$0xff]
      %v268 = vld [vmem:[%s257] sm:$0xff]
      %vm269 = vcmask 64512
      %v271 = vsel %vm269, %v267, 0
      %v274 = vsel %vm269, %v268, 0
      %276 = vmatprep.subr.mxu0 0.0
      %277 = vmatpush1.xpose.msra.mxu0 %v274
      %278 = vmatprep.subr.mxu0 0.0
      %279 = vmatpush1.xpose.msra.mxu0 0.0
      %280 = vmatprep.subr.mxu0 0.0
      %281 = vmatpush1.xpose.msra.mxu0 0.0
      %282 = vmatprep.subr.mxu0 0.0
      %283 = vmatpush1.xpose.msra.mxu0 0.0
      %284 = vmatprep.subr.mxu0 0.0
      %285 = vmatpush1.xpose.msra.mxu0 0.0
      %286 = vmatprep.subr.mxu0 0.0
      %287 = vmatpush1.xpose.msra.mxu0 0.0
      %288 = vmatprep.subr.mxu0 0.0
      %289 = vmatpush1.xpose.msra.mxu0 0.0
      %290 = vmatprep.subr.mxu0 0.0
      %291 = vmatpush1.xpose.msra.mxu0 0.0
      %292 = vmatprep.subr.mxu0 0.0
      %293 = vmatpush1.xpose.msra.mxu0 0.0
      %294 = vmatprep.subr.mxu0 0.0
      %295 = vmatpush1.xpose.msra.mxu0 0.0
      %296 = vmatprep.subr.mxu0 0.0
      %297 = vmatpush1.xpose.msra.mxu0 0.0
      %298 = vmatprep.subr.mxu0 0.0
      %299 = vmatpush1.xpose.msra.mxu0 0.0
      %300 = vmatprep.subr.mxu0 0.0
      %301 = vmatpush1.xpose.msra.mxu0 0.0
      %302 = vmatprep.subr.mxu0 0.0
      %303 = vmatpush1.xpose.msra.mxu0 0.0
      %304 = vmatprep.subr.mxu0 0.0
      %305 = vmatpush1.xpose.msra.mxu0 0.0
      %306 = vmatprep.subr.mxu0 0.0
      %307 = vmatpush1.xpose.msra.mxu0 0.0
      %308 = vmatprep.subr.mxu0 0.0
      %309 = vmatpush1.xpose.msra.mxu0 0.0
      %310 = vmatprep.subr.mxu0 0.0
      %311 = vmatpush1.xpose.msra.mxu0 0.0
      %312 = vmatprep.subr.mxu0 0.0
      %313 = vmatpush1.xpose.msra.mxu0 0.0
      %314 = vmatprep.subr.mxu0 0.0
      %315 = vmatpush1.xpose.msra.mxu0 0.0
      %316 = vmatprep.subr.mxu0 0.0
      %317 = vmatpush1.xpose.msra.mxu0 0.0
      %318 = vmatprep.subr.mxu0 0.0
      %319 = vmatpush1.xpose.msra.mxu0 0.0
      %320 = vmatprep.subr.mxu0 0.0
      %321 = vmatpush1.xpose.msra.mxu0 0.0
      %322 = vmatprep.subr.mxu0 0.0
      %323 = vmatpush1.xpose.msra.mxu0 0.0
      %324 = vmatprep.subr.mxu0 0.0
      %325 = vmatpush1.xpose.msra.mxu0 0.0
      %326 = vmatprep.subr.mxu0 0.0
      %327 = vmatpush1.xpose.msra.mxu0 0.0
      %328 = vmatprep.subr.mxu0 0.0
      %329 = vmatpush1.xpose.msra.mxu0 0.0
      %330 = vmatprep.subr.mxu0 0.0
      %331 = vmatpush1.xpose.msra.mxu0 0.0
      %332 = vmatprep.subr.mxu0 0.0
      %333 = vmatpush1.xpose.msra.mxu0 0.0
      %334 = vmatprep.subr.mxu0 0.0
      %335 = vmatpush1.xpose.msra.mxu0 0.0
      %336 = vmatprep.subr.mxu0 0.0
      %337 = vmatpush1.xpose.msra.mxu0 0.0
      %338 = vmatprep.subr.mxu0 0.0
      %339 = vmatpush1.xpose.msra.mxu0 0.0
      %340 = vmatprep.mubr.f32.mxu0 0.0
      %341 = vmatmul.mubr.f32.gmra.mrb[0].mxu0 %v271
      %v342 = vpop.f32.mrb[0].mxu0
      %v343 = vadd.f32 0.0, %v342
      %v344 = vpop.f32.mrb[0].mxu0
      %345 = vdwg.mxu0
      %v346 = vsel %vm269, %v343, -inf
      %347 = vmax.xlane.f32.xlu0 %v346
      %v348 = vpop.xlane.xlu0 %347
      %v349 = vsub.f32 %v343, %v348
      %v350 = vmul.f32 %v349, 1.442695
      %v351 = vpow.pop %v350
      %v352 = vsel %vm269, %v351, 0.0
      %353 = vadd.xlane.f32.xlu0 %v352
      %v354 = vpop.xlane.xlu0 %353
      %355 = vrot.lane.b32.xlu0 %v268, 96
      %v356 = vpop.permute.xlu0 %355
      %v359 = vsel %vm269, %v351, 0
      %361 = vmatprep.subr.mxu0 0.0
      %362 = vmatpush1.msra.mxu0 %v356
      %363 = vmatprep.subr.mxu0 0.0
      %364 = vmatpush1.msra.mxu0 0.0
      %365 = vmatprep.subr.mxu0 0.0
      %366 = vmatpush1.msra.mxu0 0.0
      %367 = vmatprep.subr.mxu0 0.0
      %368 = vmatpush1.msra.mxu0 0.0
      %369 = vmatprep.subr.mxu0 0.0
      %370 = vmatpush1.msra.mxu0 0.0
      %371 = vmatprep.subr.mxu0 0.0
      %372 = vmatpush1.msra.mxu0 0.0
      %373 = vmatprep.subr.mxu0 0.0
      %374 = vmatpush1.msra.mxu0 0.0
      %375 = vmatprep.subr.mxu0 0.0
      %376 = vmatpush1.msra.mxu0 0.0
      %377 = vmatprep.subr.mxu0 0.0
      %378 = vmatpush1.msra.mxu0 0.0
      %379 = vmatprep.subr.mxu0 0.0
      %380 = vmatpush1.msra.mxu0 0.0
      %381 = vmatprep.subr.mxu0 0.0
      %382 = vmatpush1.msra.mxu0 0.0
      %383 = vmatprep.subr.mxu0 0.0
      %384 = vmatpush1.msra.mxu0 0.0
      %385 = vmatprep.subr.mxu0 0.0
      %386 = vmatpush1.msra.mxu0 0.0
      %387 = vmatprep.subr.mxu0 0.0
      %388 = vmatpush1.msra.mxu0 0.0
      %389 = vmatprep.subr.mxu0 0.0
      %390 = vmatpush1.msra.mxu0 0.0
      %391 = vmatprep.subr.mxu0 0.0
      %392 = vmatpush1.msra.mxu0 0.0
      %393 = vmatprep.subr.mxu0 0.0
      %394 = vmatpush1.msra.mxu0 0.0
      %395 = vmatprep.subr.mxu0 0.0
      %396 = vmatpush1.msra.mxu0 0.0
      %397 = vmatprep.subr.mxu0 0.0
      %398 = vmatpush1.msra.mxu0 0.0
      %399 = vmatprep.subr.mxu0 0.0
      %400 = vmatpush1.msra.mxu0 0.0
      %401 = vmatprep.subr.mxu0 0.0
      %402 = vmatpush1.msra.mxu0 0.0
      %403 = vmatprep.subr.mxu0 0.0
      %404 = vmatpush1.msra.mxu0 0.0
      %405 = vmatprep.subr.mxu0 0.0
      %406 = vmatpush1.msra.mxu0 0.0
      %407 = vmatprep.subr.mxu0 0.0
      %408 = vmatpush1.msra.mxu0 0.0
      %409 = vmatprep.subr.mxu0 0.0
      %410 = vmatpush1.msra.mxu0 0.0
      %411 = vmatprep.subr.mxu0 0.0
      %412 = vmatpush1.msra.mxu0 0.0
      %413 = vmatprep.subr.mxu0 0.0
      %414 = vmatpush1.msra.mxu0 0.0
      %415 = vmatprep.subr.mxu0 0.0
      %416 = vmatpush1.msra.mxu0 0.0
      %417 = vmatprep.subr.mxu0 0.0
      %418 = vmatpush1.msra.mxu0 0.0
      %419 = vmatprep.subr.mxu0 0.0
      %420 = vmatpush1.msra.mxu0 0.0
      %421 = vmatprep.subr.mxu0 0.0
      %422 = vmatpush1.msra.mxu0 0.0
      %423 = vmatprep.subr.mxu0 0.0
      %424 = vmatpush1.msra.mxu0 0.0
      %425 = vmatprep.mubr.f32.mxu0 0.0
      %426 = vmatmul.mubr.f32.gmra.mrb[0].mxu0 %v359
      %v427 = vpop.f32.mrb[0].mxu0
      %v428 = vadd.f32 0.0, %v427
      %v429 = vpop.f32.mrb[0].mxu0
      %430 = vdwg.mxu0
      %v431 = vrcp.pop %v354
      %v432 = vmul.f32 %v428, %v431
      %433 = vst.msk [vmem:[#allocation2] sm:$0xff] %vm269, %v432
      %v434 = vld [vmem:[%s248] sm:$0xff]
      %v435 = vld [vmem:[%s257] sm:$0xff]
      %437 = vrot.lane.b32.xlu0 %v434, 120
      %v438 = vpop.permute.xlu0 %437
      %440 = vrot.lane.b32.xlu0 %v435, 120
      %v441 = vpop.permute.xlu0 %440
      %v442 = vsel %vm269, %v438, 0
      %v444 = vsel %vm269, %v441, 0
      %446 = vmatprep.subr.mxu0 0.0
      %447 = vmatpush1.xpose.msra.mxu0 %v444
      %448 = vmatprep.subr.mxu0 0.0
      %449 = vmatpush1.xpose.msra.mxu0 0.0
      %450 = vmatprep.subr.mxu0 0.0
      %451 = vmatpush1.xpose.msra.mxu0 0.0
      %452 = vmatprep.subr.mxu0 0.0
      %453 = vmatpush1.xpose.msra.mxu0 0.0
      %454 = vmatprep.subr.mxu0 0.0
      %455 = vmatpush1.xpose.msra.mxu0 0.0
      %456 = vmatprep.subr.mxu0 0.0
      %457 = vmatpush1.xpose.msra.mxu0 0.0
      %458 = vmatprep.subr.mxu0 0.0
      %459 = vmatpush1.xpose.msra.mxu0 0.0
      %460 = vmatprep.subr.mxu0 0.0
      %461 = vmatpush1.xpose.msra.mxu0 0.0
      %462 = vmatprep.subr.mxu0 0.0
      %463 = vmatpush1.xpose.msra.mxu0 0.0
      %464 = vmatprep.subr.mxu0 0.0
      %465 = vmatpush1.xpose.msra.mxu0 0.0
      %466 = vmatprep.subr.mxu0 0.0
      %467 = vmatpush1.xpose.msra.mxu0 0.0
      %468 = vmatprep.subr.mxu0 0.0
      %469 = vmatpush1.xpose.msra.mxu0 0.0
      %470 = vmatprep.subr.mxu0 0.0
      %471 = vmatpush1.xpose.msra.mxu0 0.0
      %472 = vmatprep.subr.mxu0 0.0
      %473 = vmatpush1.xpose.msra.mxu0 0.0
      %474 = vmatprep.subr.mxu0 0.0
      %475 = vmatpush1.xpose.msra.mxu0 0.0
      %476 = vmatprep.subr.mxu0 0.0
      %477 = vmatpush1.xpose.msra.mxu0 0.0
      %478 = vmatprep.subr.mxu0 0.0
      %479 = vmatpush1.xpose.msra.mxu0 0.0
      %480 = vmatprep.subr.mxu0 0.0
      %481 = vmatpush1.xpose.msra.mxu0 0.0
      %482 = vmatprep.subr.mxu0 0.0
      %483 = vmatpush1.xpose.msra.mxu0 0.0
      %484 = vmatprep.subr.mxu0 0.0
      %485 = vmatpush1.xpose.msra.mxu0 0.0
      %486 = vmatprep.subr.mxu0 0.0
      %487 = vmatpush1.xpose.msra.mxu0 0.0
      %488 = vmatprep.subr.mxu0 0.0
      %489 = vmatpush1.xpose.msra.mxu0 0.0
      %490 = vmatprep.subr.mxu0 0.0
      %491 = vmatpush1.xpose.msra.mxu0 0.0
      %492 = vmatprep.subr.mxu0 0.0
      %493 = vmatpush1.xpose.msra.mxu0 0.0
      %494 = vmatprep.subr.mxu0 0.0
      %495 = vmatpush1.xpose.msra.mxu0 0.0
      %496 = vmatprep.subr.mxu0 0.0
      %497 = vmatpush1.xpose.msra.mxu0 0.0
      %498 = vmatprep.subr.mxu0 0.0
      %499 = vmatpush1.xpose.msra.mxu0 0.0
      %500 = vmatprep.subr.mxu0 0.0
      %501 = vmatpush1.xpose.msra.mxu0 0.0
      %502 = vmatprep.subr.mxu0 0.0
      %503 = vmatpush1.xpose.msra.mxu0 0.0
      %504 = vmatprep.subr.mxu0 0.0
      %505 = vmatpush1.xpose.msra.mxu0 0.0
      %506 = vmatprep.subr.mxu0 0.0
      %507 = vmatpush1.xpose.msra.mxu0 0.0
      %508 = vmatprep.subr.mxu0 0.0
      %509 = vmatpush1.xpose.msra.mxu0 0.0
      %510 = vmatprep.mubr.f32.mxu0 0.0
      %511 = vmatmul.mubr.f32.gmra.mrb[0].mxu0 %v442
      %v512 = vpop.f32.mrb[0].mxu0
      %v513 = vadd.f32 0.0, %v512
      %v514 = vpop.f32.mrb[0].mxu0
      %515 = vdwg.mxu0
      %v516 = vsel %vm269, %v513, -inf
      %517 = vmax.xlane.f32.xlu0 %v516
      %v518 = vpop.xlane.xlu0 %517
      %v519 = vsub.f32 %v513, %v518
      %v520 = vmul.f32 %v519, 1.442695
      %v521 = vpow.pop %v520
      %v522 = vsel %vm269, %v521, 0.0
      %523 = vadd.xlane.f32.xlu0 %v522
      %v524 = vpop.xlane.xlu0 %523
      %525 = vrot.lane.b32.xlu0 %v435, 88
      %v526 = vpop.permute.xlu0 %525
      %v529 = vsel %vm269, %v521, 0
      %531 = vmatprep.subr.mxu0 0.0
      %532 = vmatpush1.msra.mxu0 %v526
      %533 = vmatprep.subr.mxu0 0.0
      %534 = vmatpush1.msra.mxu0 0.0
      %535 = vmatprep.subr.mxu0 0.0
      %536 = vmatpush1.msra.mxu0 0.0
      %537 = vmatprep.subr.mxu0 0.0
      %538 = vmatpush1.msra.mxu0 0.0
      %539 = vmatprep.subr.mxu0 0.0
      %540 = vmatpush1.msra.mxu0 0.0
      %541 = vmatprep.subr.mxu0 0.0
      %542 = vmatpush1.msra.mxu0 0.0
      %543 = vmatprep.subr.mxu0 0.0
      %544 = vmatpush1.msra.mxu0 0.0
      %545 = vmatprep.subr.mxu0 0.0
      %546 = vmatpush1.msra.mxu0 0.0
      %547 = vmatprep.subr.mxu0 0.0
      %548 = vmatpush1.msra.mxu0 0.0
      %549 = vmatprep.subr.mxu0 0.0
      %550 = vmatpush1.msra.mxu0 0.0
      %551 = vmatprep.subr.mxu0 0.0
      %552 = vmatpush1.msra.mxu0 0.0
      %553 = vmatprep.subr.mxu0 0.0
      %554 = vmatpush1.msra.mxu0 0.0
      %555 = vmatprep.subr.mxu0 0.0
      %556 = vmatpush1.msra.mxu0 0.0
      %557 = vmatprep.subr.mxu0 0.0
      %558 = vmatpush1.msra.mxu0 0.0
      %559 = vmatprep.subr.mxu0 0.0
      %560 = vmatpush1.msra.mxu0 0.0
      %561 = vmatprep.subr.mxu0 0.0
      %562 = vmatpush1.msra.mxu0 0.0
      %563 = vmatprep.subr.mxu0 0.0
      %564 = vmatpush1.msra.mxu0 0.0
      %565 = vmatprep.subr.mxu0 0.0
      %566 = vmatpush1.msra.mxu0 0.0
      %567 = vmatprep.subr.mxu0 0.0
      %568 = vmatpush1.msra.mxu0 0.0
      %569 = vmatprep.subr.mxu0 0.0
      %570 = vmatpush1.msra.mxu0 0.0
      %571 = vmatprep.subr.mxu0 0.0
      %572 = vmatpush1.msra.mxu0 0.0
      %573 = vmatprep.subr.mxu0 0.0
      %574 = vmatpush1.msra.mxu0 0.0
      %575 = vmatprep.subr.mxu0 0.0
      %576 = vmatpush1.msra.mxu0 0.0
      %577 = vmatprep.subr.mxu0 0.0
      %578 = vmatpush1.msra.mxu0 0.0
      %579 = vmatprep.subr.mxu0 0.0
      %580 = vmatpush1.msra.mxu0 0.0
      %581 = vmatprep.subr.mxu0 0.0
      %582 = vmatpush1.msra.mxu0 0.0
      %583 = vmatprep.subr.mxu0 0.0
      %584 = vmatpush1.msra.mxu0 0.0
      %585 = vmatprep.subr.mxu0 0.0
      %586 = vmatpush1.msra.mxu0 0.0
      %587 = vmatprep.subr.mxu0 0.0
      %588 = vmatpush1.msra.mxu0 0.0
      %589 = vmatprep.subr.mxu0 0.0
      %590 = vmatpush1.msra.mxu0 0.0
      %591 = vmatprep.subr.mxu0 0.0
      %592 = vmatpush1.msra.mxu0 0.0
      %593 = vmatprep.subr.mxu0 0.0
      %594 = vmatpush1.msra.mxu0 0.0
      %595 = vmatprep.mubr.f32.mxu0 0.0
      %596 = vmatmul.mubr.f32.gmra.mrb[0].mxu0 %v529
      %v597 = vpop.f32.mrb[0].mxu0
      %v598 = vadd.f32 0.0, %v597
      %v599 = vpop.f32.mrb[0].mxu0
      %600 = vdwg.mxu0
      %v601 = vrcp.pop %v524
      %v602 = vmul.f32 %v598, %v601
      %604 = vrot.lane.b32.xlu0 %v602, 8
      %v605 = vpop.permute.xlu0 %604
      %vm607 = vcmask 130112
      %608 = vst.msk [vmem:[#allocation2] sm:$0xff] %vm607, %v605
      %v609 = vld [vmem:[%s248] sm:$0xff]
      %v610 = vld [vmem:[%s257] sm:$0xff]
      %612 = vrot.lane.b32.xlu0 %v609, 112
      %v613 = vpop.permute.xlu0 %612
      %615 = vrot.lane.b32.xlu0 %v610, 112
      %v616 = vpop.permute.xlu0 %615
      %v617 = vsel %vm269, %v613, 0
      %v619 = vsel %vm269, %v616, 0
      %621 = vmatprep.subr.mxu0 0.0
      %622 = vmatpush1.xpose.msra.mxu0 %v619
      %623 = vmatprep.subr.mxu0 0.0
      %624 = vmatpush1.xpose.msra.mxu0 0.0
      %625 = vmatprep.subr.mxu0 0.0
      %626 = vmatpush1.xpose.msra.mxu0 0.0
      %627 = vmatprep.subr.mxu0 0.0
      %628 = vmatpush1.xpose.msra.mxu0 0.0
      %629 = vmatprep.subr.mxu0 0.0
      %630 = vmatpush1.xpose.msra.mxu0 0.0
      %631 = vmatprep.subr.mxu0 0.0
      %632 = vmatpush1.xpose.msra.mxu0 0.0
      %633 = vmatprep.subr.mxu0 0.0
      %634 = vmatpush1.xpose.msra.mxu0 0.0
      %635 = vmatprep.subr.mxu0 0.0
      %636 = vmatpush1.xpose.msra.mxu0 0.0
      %637 = vmatprep.subr.mxu0 0.0
      %638 = vmatpush1.xpose.msra.mxu0 0.0
      %639 = vmatprep.subr.mxu0 0.0
      %640 = vmatpush1.xpose.msra.mxu0 0.0
      %641 = vmatprep.subr.mxu0 0.0
      %642 = vmatpush1.xpose.msra.mxu0 0.0
      %643 = vmatprep.subr.mxu0 0.0
      %644 = vmatpush1.xpose.msra.mxu0 0.0
      %645 = vmatprep.subr.mxu0 0.0
      %646 = vmatpush1.xpose.msra.mxu0 0.0
      %647 = vmatprep.subr.mxu0 0.0
      %648 = vmatpush1.xpose.msra.mxu0 0.0
      %649 = vmatprep.subr.mxu0 0.0
      %650 = vmatpush1.xpose.msra.mxu0 0.0
      %651 = vmatprep.subr.mxu0 0.0
      %652 = vmatpush1.xpose.msra.mxu0 0.0
      %653 = vmatprep.subr.mxu0 0.0
      %654 = vmatpush1.xpose.msra.mxu0 0.0
      %655 = vmatprep.subr.mxu0 0.0
      %656 = vmatpush1.xpose.msra.mxu0 0.0
      %657 = vmatprep.subr.mxu0 0.0
      %658 = vmatpush1.xpose.msra.mxu0 0.0
      %659 = vmatprep.subr.mxu0 0.0
      %660 = vmatpush1.xpose.msra.mxu0 0.0
      %661 = vmatprep.subr.mxu0 0.0
      %662 = vmatpush1.xpose.msra.mxu0 0.0
      %663 = vmatprep.subr.mxu0 0.0
      %664 = vmatpush1.xpose.msra.mxu0 0.0
      %665 = vmatprep.subr.mxu0 0.0
      %666 = vmatpush1.xpose.msra.mxu0 0.0
      %667 = vmatprep.subr.mxu0 0.0
      %668 = vmatpush1.xpose.msra.mxu0 0.0
      %669 = vmatprep.subr.mxu0 0.0
      %670 = vmatpush1.xpose.msra.mxu0 0.0
      %671 = vmatprep.subr.mxu0 0.0
      %672 = vmatpush1.xpose.msra.mxu0 0.0
      %673 = vmatprep.subr.mxu0 0.0
      %674 = vmatpush1.xpose.msra.mxu0 0.0
      %675 = vmatprep.subr.mxu0 0.0
      %676 = vmatpush1.xpose.msra.mxu0 0.0
      %677 = vmatprep.subr.mxu0 0.0
      %678 = vmatpush1.xpose.msra.mxu0 0.0
      %679 = vmatprep.subr.mxu0 0.0
      %680 = vmatpush1.xpose.msra.mxu0 0.0
      %681 = vmatprep.subr.mxu0 0.0
      %682 = vmatpush1.xpose.msra.mxu0 0.0
      %683 = vmatprep.subr.mxu0 0.0
      %684 = vmatpush1.xpose.msra.mxu0 0.0
      %685 = vmatprep.mubr.f32.mxu0 0.0
      %686 = vmatmul.mubr.f32.gmra.mrb[0].mxu0 %v617
      %v687 = vpop.f32.mrb[0].mxu0
      %v688 = vadd.f32 0.0, %v687
      %v689 = vpop.f32.mrb[0].mxu0
      %690 = vdwg.mxu0
      %v691 = vsel %vm269, %v688, -inf
      %692 = vmax.xlane.f32.xlu0 %v691
      %v693 = vpop.xlane.xlu0 %692
      %v694 = vsub.f32 %v688, %v693
      %v695 = vmul.f32 %v694, 1.442695
      %v696 = vpow.pop %v695
      %v697 = vsel %vm269, %v696, 0.0
      %698 = vadd.xlane.f32.xlu0 %v697
      %v699 = vpop.xlane.xlu0 %698
      %700 = vrot.lane.b32.xlu0 %v610, 80
      %v701 = vpop.permute.xlu0 %700
      %v704 = vsel %vm269, %v696, 0
      %706 = vmatprep.subr.mxu0 0.0
      %707 = vmatpush1.msra.mxu0 %v701
      %708 = vmatprep.subr.mxu0 0.0
      %709 = vmatpush1.msra.mxu0 0.0
      %710 = vmatprep.subr.mxu0 0.0
      %711 = vmatpush1.msra.mxu0 0.0
      %712 = vmatprep.subr.mxu0 0.0
      %713 = vmatpush1.msra.mxu0 0.0
      %714 = vmatprep.subr.mxu0 0.0
      %715 = vmatpush1.msra.mxu0 0.0
      %716 = vmatprep.subr.mxu0 0.0
      %717 = vmatpush1.msra.mxu0 0.0
      %718 = vmatprep.subr.mxu0 0.0
      %719 = vmatpush1.msra.mxu0 0.0
      %720 = vmatprep.subr.mxu0 0.0
      %721 = vmatpush1.msra.mxu0 0.0
      %722 = vmatprep.subr.mxu0 0.0
      %723 = vmatpush1.msra.mxu0 0.0
      %724 = vmatprep.subr.mxu0 0.0
      %725 = vmatpush1.msra.mxu0 0.0
      %726 = vmatprep.subr.mxu0 0.0
      %727 = vmatpush1.msra.mxu0 0.0
      %728 = vmatprep.subr.mxu0 0.0
      %729 = vmatpush1.msra.mxu0 0.0
      %730 = vmatprep.subr.mxu0 0.0
      %731 = vmatpush1.msra.mxu0 0.0
      %732 = vmatprep.subr.mxu0 0.0
      %733 = vmatpush1.msra.mxu0 0.0
      %734 = vmatprep.subr.mxu0 0.0
      %735 = vmatpush1.msra.mxu0 0.0
      %736 = vmatprep.subr.mxu0 0.0
      %737 = vmatpush1.msra.mxu0 0.0
      %738 = vmatprep.subr.mxu0 0.0
      %739 = vmatpush1.msra.mxu0 0.0
      %740 = vmatprep.subr.mxu0 0.0
      %741 = vmatpush1.msra.mxu0 0.0
      %742 = vmatprep.subr.mxu0 0.0
      %743 = vmatpush1.msra.mxu0 0.0
      %744 = vmatprep.subr.mxu0 0.0
      %745 = vmatpush1.msra.mxu0 0.0
      %746 = vmatprep.subr.mxu0 0.0
      %747 = vmatpush1.msra.mxu0 0.0
      %748 = vmatprep.subr.mxu0 0.0
      %749 = vmatpush1.msra.mxu0 0.0
      %750 = vmatprep.subr.mxu0 0.0
      %751 = vmatpush1.msra.mxu0 0.0
      %752 = vmatprep.subr.mxu0 0.0
      %753 = vmatpush1.msra.mxu0 0.0
      %754 = vmatprep.subr.mxu0 0.0
      %755 = vmatpush1.msra.mxu0 0.0
      %756 = vmatprep.subr.mxu0 0.0
      %757 = vmatpush1.msra.mxu0 0.0
      %758 = vmatprep.subr.mxu0 0.0
      %759 = vmatpush1.msra.mxu0 0.0
      %760 = vmatprep.subr.mxu0 0.0
      %761 = vmatpush1.msra.mxu0 0.0
      %762 = vmatprep.subr.mxu0 0.0
      %763 = vmatpush1.msra.mxu0 0.0
      %764 = vmatprep.subr.mxu0 0.0
      %765 = vmatpush1.msra.mxu0 0.0
      %766 = vmatprep.subr.mxu0 0.0
      %767 = vmatpush1.msra.mxu0 0.0
      %768 = vmatprep.subr.mxu0 0.0
      %769 = vmatpush1.msra.mxu0 0.0
      %770 = vmatprep.mubr.f32.mxu0 0.0
      %771 = vmatmul.mubr.f32.gmra.mrb[0].mxu0 %v704
      %v772 = vpop.f32.mrb[0].mxu0
      %v773 = vadd.f32 0.0, %v772
      %v774 = vpop.f32.mrb[0].mxu0
      %775 = vdwg.mxu0
      %v776 = vrcp.pop %v699
      %v777 = vmul.f32 %v773, %v776
      %779 = vrot.lane.b32.xlu0 %v777, 16
      %v780 = vpop.permute.xlu0 %779
      %vm782 = vcmask 195712
      %783 = vst.msk [vmem:[#allocation2] sm:$0xff] %vm782, %v780
      %v784 = vld [vmem:[%s248] sm:$0xff]
      %v785 = vld [vmem:[%s257] sm:$0xff]
      %787 = vrot.lane.b32.xlu0 %v784, 104
      %v788 = vpop.permute.xlu0 %787
      %790 = vrot.lane.b32.xlu0 %v785, 104
      %v791 = vpop.permute.xlu0 %790
      %v792 = vsel %vm269, %v788, 0
      %v794 = vsel %vm269, %v791, 0
      %796 = vmatprep.subr.mxu0 0.0
      %797 = vmatpush1.xpose.msra.mxu0 %v794
      %798 = vmatprep.subr.mxu0 0.0
      %799 = vmatpush1.xpose.msra.mxu0 0.0
      %800 = vmatprep.subr.mxu0 0.0
      %801 = vmatpush1.xpose.msra.mxu0 0.0
      %802 = vmatprep.subr.mxu0 0.0
      %803 = vmatpush1.xpose.msra.mxu0 0.0
      %804 = vmatprep.subr.mxu0 0.0
      %805 = vmatpush1.xpose.msra.mxu0 0.0
      %806 = vmatprep.subr.mxu0 0.0
      %807 = vmatpush1.xpose.msra.mxu0 0.0
      %808 = vmatprep.subr.mxu0 0.0
      %809 = vmatpush1.xpose.msra.mxu0 0.0
      %810 = vmatprep.subr.mxu0 0.0
      %811 = vmatpush1.xpose.msra.mxu0 0.0
      %812 = vmatprep.subr.mxu0 0.0
      %813 = vmatpush1.xpose.msra.mxu0 0.0
      %814 = vmatprep.subr.mxu0 0.0
      %815 = vmatpush1.xpose.msra.mxu0 0.0
      %816 = vmatprep.subr.mxu0 0.0
      %817 = vmatpush1.xpose.msra.mxu0 0.0
      %818 = vmatprep.subr.mxu0 0.0
      %819 = vmatpush1.xpose.msra.mxu0 0.0
      %820 = vmatprep.subr.mxu0 0.0
      %821 = vmatpush1.xpose.msra.mxu0 0.0
      %822 = vmatprep.subr.mxu0 0.0
      %823 = vmatpush1.xpose.msra.mxu0 0.0
      %824 = vmatprep.subr.mxu0 0.0
      %825 = vmatpush1.xpose.msra.mxu0 0.0
      %826 = vmatprep.subr.mxu0 0.0
      %827 = vmatpush1.xpose.msra.mxu0 0.0
      %828 = vmatprep.subr.mxu0 0.0
      %829 = vmatpush1.xpose.msra.mxu0 0.0
      %830 = vmatprep.subr.mxu0 0.0
      %831 = vmatpush1.xpose.msra.mxu0 0.0
      %832 = vmatprep.subr.mxu0 0.0
      %833 = vmatpush1.xpose.msra.mxu0 0.0
      %834 = vmatprep.subr.mxu0 0.0
      %835 = vmatpush1.xpose.msra.mxu0 0.0
      %836 = vmatprep.subr.mxu0 0.0
      %837 = vmatpush1.xpose.msra.mxu0 0.0
      %838 = vmatprep.subr.mxu0 0.0
      %839 = vmatpush1.xpose.msra.mxu0 0.0
      %840 = vmatprep.subr.mxu0 0.0
      %841 = vmatpush1.xpose.msra.mxu0 0.0
      %842 = vmatprep.subr.mxu0 0.0
      %843 = vmatpush1.xpose.msra.mxu0 0.0
      %844 = vmatprep.subr.mxu0 0.0
      %845 = vmatpush1.xpose.msra.mxu0 0.0
      %846 = vmatprep.subr.mxu0 0.0
      %847 = vmatpush1.xpose.msra.mxu0 0.0
      %848 = vmatprep.subr.mxu0 0.0
      %849 = vmatpush1.xpose.msra.mxu0 0.0
      %850 = vmatprep.subr.mxu0 0.0
      %851 = vmatpush1.xpose.msra.mxu0 0.0
      %852 = vmatprep.subr.mxu0 0.0
      %853 = vmatpush1.xpose.msra.mxu0 0.0
      %854 = vmatprep.subr.mxu0 0.0
      %855 = vmatpush1.xpose.msra.mxu0 0.0
      %856 = vmatprep.subr.mxu0 0.0
      %857 = vmatpush1.xpose.msra.mxu0 0.0
      %858 = vmatprep.subr.mxu0 0.0
      %859 = vmatpush1.xpose.msra.mxu0 0.0
      %860 = vmatprep.mubr.f32.mxu0 0.0
      %861 = vmatmul.mubr.f32.gmra.mrb[0].mxu0 %v792
      %v862 = vpop.f32.mrb[0].mxu0
      %v863 = vadd.f32 0.0, %v862
      %v864 = vpop.f32.mrb[0].mxu0
      %865 = vdwg.mxu0
      %v866 = vsel %vm269, %v863, -inf
      %867 = vmax.xlane.f32.xlu0 %v866
      %v868 = vpop.xlane.xlu0 %867
      %v869 = vsub.f32 %v863, %v868
      %v870 = vmul.f32 %v869, 1.442695
      %v871 = vpow.pop %v870
      %v872 = vsel %vm269, %v871, 0.0
      %873 = vadd.xlane.f32.xlu0 %v872
      %v874 = vpop.xlane.xlu0 %873
      %875 = vrot.lane.b32.xlu0 %v785, 72
      %v876 = vpop.permute.xlu0 %875
      %v879 = vsel %vm269, %v871, 0
      %881 = vmatprep.subr.mxu0 0.0
      %882 = vmatpush1.msra.mxu0 %v876
      %883 = vmatprep.subr.mxu0 0.0
      %884 = vmatpush1.msra.mxu0 0.0
      %885 = vmatprep.subr.mxu0 0.0
      %886 = vmatpush1.msra.mxu0 0.0
      %887 = vmatprep.subr.mxu0 0.0
      %888 = vmatpush1.msra.mxu0 0.0
      %889 = vmatprep.subr.mxu0 0.0
      %890 = vmatpush1.msra.mxu0 0.0
      %891 = vmatprep.subr.mxu0 0.0
      %892 = vmatpush1.msra.mxu0 0.0
      %893 = vmatprep.subr.mxu0 0.0
      %894 = vmatpush1.msra.mxu0 0.0
      %895 = vmatprep.subr.mxu0 0.0
      %896 = vmatpush1.msra.mxu0 0.0
      %897 = vmatprep.subr.mxu0 0.0
      %898 = vmatpush1.msra.mxu0 0.0
      %899 = vmatprep.subr.mxu0 0.0
      %900 = vmatpush1.msra.mxu0 0.0
      %901 = vmatprep.subr.mxu0 0.0
      %902 = vmatpush1.msra.mxu0 0.0
      %903 = vmatprep.subr.mxu0 0.0
      %904 = vmatpush1.msra.mxu0 0.0
      %905 = vmatprep.subr.mxu0 0.0
      %906 = vmatpush1.msra.mxu0 0.0
      %907 = vmatprep.subr.mxu0 0.0
      %908 = vmatpush1.msra.mxu0 0.0
      %909 = vmatprep.subr.mxu0 0.0
      %910 = vmatpush1.msra.mxu0 0.0
      %911 = vmatprep.subr.mxu0 0.0
      %912 = vmatpush1.msra.mxu0 0.0
      %913 = vmatprep.subr.mxu0 0.0
      %914 = vmatpush1.msra.mxu0 0.0
      %915 = vmatprep.subr.mxu0 0.0
      %916 = vmatpush1.msra.mxu0 0.0
      %917 = vmatprep.subr.mxu0 0.0
      %918 = vmatpush1.msra.mxu0 0.0
      %919 = vmatprep.subr.mxu0 0.0
      %920 = vmatpush1.msra.mxu0 0.0
      %921 = vmatprep.subr.mxu0 0.0
      %922 = vmatpush1.msra.mxu0 0.0
      %923 = vmatprep.subr.mxu0 0.0
      %924 = vmatpush1.msra.mxu0 0.0
      %925 = vmatprep.subr.mxu0 0.0
      %926 = vmatpush1.msra.mxu0 0.0
      %927 = vmatprep.subr.mxu0 0.0
      %928 = vmatpush1.msra.mxu0 0.0
      %929 = vmatprep.subr.mxu0 0.0
      %930 = vmatpush1.msra.mxu0 0.0
      %931 = vmatprep.subr.mxu0 0.0
      %932 = vmatpush1.msra.mxu0 0.0
      %933 = vmatprep.subr.mxu0 0.0
      %934 = vmatpush1.msra.mxu0 0.0
      %935 = vmatprep.subr.mxu0 0.0
      %936 = vmatpush1.msra.mxu0 0.0
      %937 = vmatprep.subr.mxu0 0.0
      %938 = vmatpush1.msra.mxu0 0.0
      %939 = vmatprep.subr.mxu0 0.0
      %940 = vmatpush1.msra.mxu0 0.0
      %941 = vmatprep.subr.mxu0 0.0
      %942 = vmatpush1.msra.mxu0 0.0
      %943 = vmatprep.subr.mxu0 0.0
      %944 = vmatpush1.msra.mxu0 0.0
      %945 = vmatprep.mubr.f32.mxu0 0.0
      %946 = vmatmul.mubr.f32.gmra.mrb[0].mxu0 %v879
      %v947 = vpop.f32.mrb[0].mxu0
      %v948 = vadd.f32 0.0, %v947
      %v949 = vpop.f32.mrb[0].mxu0
      %950 = vdwg.mxu0
      %v951 = vrcp.pop %v874
      %v952 = vmul.f32 %v948, %v951
      %954 = vrot.lane.b32.xlu0 %v952, 24
      %v955 = vpop.permute.xlu0 %954
      %vm957 = vcmask 261312
      %958 = vst.msk [vmem:[#allocation2] sm:$0xff] %vm957, %v955
      %v959 = vld [vmem:[#allocation2] sm:$0xff]
      %v960 = vld [vmem:[%s2] sm:$0xff]
      %v961 = vld [vmem:[%s2 + $0x8] sm:$0xff]
      %v962 = vld [vmem:[%s2 + $0x10] sm:$0xff]
      %v963 = vld [vmem:[%s2 + $0x18] sm:$0xff]
      %v964 = vld [vmem:[%s3] sm:$0x1]
      %v966 = vlaneseq
      %v967 = vshrl.u32 %v966, 7
      %v968 = vsub.s32 0, %v967
      %v969 = vrot.slane %v964, %v968
      %vm971 = vcmask 261120
      %v973 = vsel %vm971, %v959, 0
      %975 = vmatprep.subr.mxu0 0.0
      %976 = vmatpush1.msra.mxu0 %v960
      %977 = vmatprep.subr.mxu0 0.0
      %978 = vmatpush1.msra.mxu0 %v961
      %979 = vmatprep.subr.mxu0 0.0
      %980 = vmatpush1.msra.mxu0 %v962
      %981 = vmatprep.subr.mxu0 0.0
      %982 = vmatpush1.msra.mxu0 %v963
      %983 = vmatprep.subr.mxu0 0.0
      %984 = vmatpush1.msra.mxu0 0.0
      %985 = vmatprep.subr.mxu0 0.0
      %986 = vmatpush1.msra.mxu0 0.0
      %987 = vmatprep.subr.mxu0 0.0
      %988 = vmatpush1.msra.mxu0 0.0
      %989 = vmatprep.subr.mxu0 0.0
      %990 = vmatpush1.msra.mxu0 0.0
      %991 = vmatprep.subr.mxu0 0.0
      %992 = vmatpush1.msra.mxu0 0.0
      %993 = vmatprep.subr.mxu0 0.0
      %994 = vmatpush1.msra.mxu0 0.0
      %995 = vmatprep.subr.mxu0 0.0
      %996 = vmatpush1.msra.mxu0 0.0
      %997 = vmatprep.subr.mxu0 0.0
      %998 = vmatpush1.msra.mxu0 0.0
      %999 = vmatprep.subr.mxu0 0.0
      %1000 = vmatpush1.msra.mxu0 0.0
      %1001 = vmatprep.subr.mxu0 0.0
      %1002 = vmatpush1.msra.mxu0 0.0
      %1003 = vmatprep.subr.mxu0 0.0
      %1004 = vmatpush1.msra.mxu0 0.0
      %1005 = vmatprep.subr.mxu0 0.0
      %1006 = vmatpush1.msra.mxu0 0.0
      %1007 = vmatprep.subr.mxu0 0.0
      %1008 = vmatpush1.msra.mxu0 0.0
      %1009 = vmatprep.subr.mxu0 0.0
      %1010 = vmatpush1.msra.mxu0 0.0
      %1011 = vmatprep.subr.mxu0 0.0
      %1012 = vmatpush1.msra.mxu0 0.0
      %1013 = vmatprep.subr.mxu0 0.0
      %1014 = vmatpush1.msra.mxu0 0.0
      %1015 = vmatprep.subr.mxu0 0.0
      %1016 = vmatpush1.msra.mxu0 0.0
      %1017 = vmatprep.subr.mxu0 0.0
      %1018 = vmatpush1.msra.mxu0 0.0
      %1019 = vmatprep.subr.mxu0 0.0
      %1020 = vmatpush1.msra.mxu0 0.0
      %1021 = vmatprep.subr.mxu0 0.0
      %1022 = vmatpush1.msra.mxu0 0.0
      %1023 = vmatprep.subr.mxu0 0.0
      %1024 = vmatpush1.msra.mxu0 0.0
      %1025 = vmatprep.subr.mxu0 0.0
      %1026 = vmatpush1.msra.mxu0 0.0
      %1027 = vmatprep.subr.mxu0 0.0
      %1028 = vmatpush1.msra.mxu0 0.0
      %1029 = vmatprep.subr.mxu0 0.0
      %1030 = vmatpush1.msra.mxu0 0.0
      %1031 = vmatprep.subr.mxu0 0.0
      %1032 = vmatpush1.msra.mxu0 0.0
      %1033 = vmatprep.subr.mxu0 0.0
      %1034 = vmatpush1.msra.mxu0 0.0
      %1035 = vmatprep.subr.mxu0 0.0
      %1036 = vmatpush1.msra.mxu0 0.0
      %1037 = vmatprep.subr.mxu0 0.0
      %1038 = vmatpush1.msra.mxu0 0.0
      %1039 = vmatprep.mubr.f32.mxu0 0.0
      %1040 = vmatmul.mubr.f32.gmra.mrb[0].mxu0 %v973
      %v1041 = vpop.f32.mrb[0].mxu0
      %v1042 = vadd.f32 %v969, %v1041
      %v1043 = vpop.f32.mrb[0].mxu0
      %1044 = vdwg.mxu0
      %1045 = vst.msk [vmem:[%s266] sm:$0xff] %vm971, %v1042
      %p1046 = scmp.lt.s32.totalorder %s19, 1
      %s1047 = scalar_select %p1046, %s19, 1
      %p1048 = scmp.lt.s32.totalorder %s20, 1
      %s1049 = scalar_select %p1048, %s20, 1
      %s1050 = smul.addr %s1047, 2
      %s1051 = sadd.s32 %s1049, %s1050
      %s1052 = smul.addr %s1051, 8
      %s1053 = scalar_lea.vmem %s4, %s1052
      // Predicated region
      $region37: #{cross_modal_attention_fwd.5} parent=35 // pred_check
        %p1054 = pneg %p147
      $region38: #{cross_modal_attention_fwd.5} parent=35 // pred_check_branch
        %1056 = sbr.rel (%p1054) target = $region40
      $region39: #{cross_modal_attention_fwd.5} parent=35 // pred_region
        _
      $region40: #{cross_modal_attention_fwd.5} parent=35 // pred_fallthru
        _
    $region36: #{cross_modal_attention_fwd.5} parent=5 // pred_fallthru
      _
    %p1057 = scmp.le.s32.totalorder 2, %s10
    // Predicated region
    $region41: #{cross_modal_attention_fwd.5} parent=5 // pred_check
      %p1058 = pneg %p1057
    $region42: #{cross_modal_attention_fwd.5} parent=5 // pred_check_branch
      %1060 = sbr.rel (%p1058) target = $region44
    $region43: #{cross_modal_attention_fwd.5} parent=5 // pred_region
      %s1061 = ssub.s32 %s10, 2
      // Predicated region
      $region45: #{cross_modal_attention_fwd.5} parent=43 // pred_check
        %p1062 = pneg %p153
      $region46: #{cross_modal_attention_fwd.5} parent=43 // pred_check_branch
        %1064 = sbr.rel (%p1062) target = $region48
      $region47: #{cross_modal_attention_fwd.5} parent=43 // pred_region
        %p1065 = scmp.lt.s32.totalorder %s21, 1
        %s1066 = scalar_select %p1065, %s21, 1
        %p1067 = scmp.lt.s32.totalorder %s22, 1
        %s1068 = scalar_select %p1067, %s22, 1
        %s1069 = smul.addr %s1066, 2
        %s1070 = sadd.s32 %s1068, %s1069
        %s1071 = smul.addr %s1070, 8
        %s1072 = scalar_lea.vmem %s4, %s1071
      $region48: #{cross_modal_attention_fwd.5} parent=43 // pred_fallthru
        _
    $region44: #{cross_modal_attention_fwd.5} parent=5 // pred_fallthru
      _
  $region6: #{cross_modal_attention_fwd.5} parent=0 // loop_footer
    %s14 = sadd.s32 1, %s10
  $region7: #{cross_modal_attention_fwd.5} parent=0 // loop_footer_branch
    %9 = sbr.rel target = $region3
  $region8: #{cross_modal_attention_fwd.5} parent=0 // loop_exit
    _

</llo_original>
